<compile_context>
chip_gen: v7x
topology: tpu7x:2x2x1
jax: 0.10.0
libtpu: 0.0.40
codegen_flags: <defaults>
</compile_context>

<pallas_src>
import numpy as np
import jax
import jax.numpy as jnp
from jax import lax
from jax.experimental import pallas as pl
from jax.experimental.pallas import tpu as pltpu

N = 32                               # CifarNet hardcodes 32x32 planes
SIGMA = 3.0
TRUNCATE = 4
LW = int(TRUNCATE * SIGMA + 0.5)     # 12 -> 25-tap gaussian, padding 12
EPS = 1e-9
HIGH_T = 0.2
LOW_T = 0.1
# thres == 0.0: magnitude = sqrt(mag2 + eps) > 0 always, so the reference's
# `magnitude * (magnitude > thres)` step is a no-op and is dropped.
HYST_ITERS = 2 * (N + N)             # fixed-trip flood-fill depth


def _build_matrices(n=N):
    """Constant nxn operator matrices used by the kernel, stacked [7, n, n].

    0: G    gaussian Toeplitz (zero-padded 25-tap depthwise conv1d)
    1: SR   [1,2,1] smoothing, replicate padding (symmetric)
    2: DR   [-1,0,1] derivative, replicate padding (left/row operator)
    3: DRT  DR transposed (right/column operator)
    4: SH   unit shift: (SH  @ X)[i] = X[i+1] ; (X @ SH )[:, j] = X[:, j-1]
    5: SHT  unit shift: (SHT @ X)[i] = X[i-1] ; (X @ SHT)[:, j] = X[:, j+1]
    6: T3   SH + I + SHT  (zero-padded 3-point neighborhood sum)
    """
    t = np.arange(-LW, LW + 1, dtype=np.float64)
    phi = np.exp(-0.5 * t * t / (SIGMA * SIGMA))
    phi /= phi.sum()
    w = phi[::-1]                                    # symmetric anyway
    idx = np.arange(n)
    d = idx[None, :] - idx[:, None] + LW
    G = np.where((d >= 0) & (d <= 2 * LW), w[np.clip(d, 0, 2 * LW)], 0.0)

    I = np.eye(n)
    SH = np.zeros((n, n))
    SH[np.arange(n - 1), np.arange(1, n)] = 1.0
    SHT = SH.T.copy()
    SR = SHT + 2.0 * I + SH                          # [1,2,1] replicate smooth
    SR[0, 0] += 1.0
    SR[n - 1, n - 1] += 1.0
    DR = SH - SHT                                    # [-1,0,1] replicate deriv
    DR[0, 0] -= 1.0
    DR[n - 1, n - 1] += 1.0
    DRT = DR.T.copy()
    T3 = SH + I + SHT
    return jnp.asarray(np.stack([G, SR, DR, DRT, SH, SHT, T3]).astype(np.float32))


def canny_kernel(x_ref, mats_ref, mask_ref, out_ref):
    f32 = jnp.float32
    G, SR, DR, DRT = mats_ref[0], mats_ref[1], mats_ref[2], mats_ref[3]
    SH, SHT, T3 = mats_ref[4], mats_ref[5], mats_ref[6]
    mask = mask_ref[...]

    def mm(a, b):
        return jnp.dot(a, b, preferred_element_type=jnp.float32)

    # grayscale: mean over channels of x*0.5+0.5  ==  (x0+x1+x2)/6 + 0.5
    gray = (x_ref[0] + x_ref[1] + x_ref[2]) * (1.0 / 6.0) + 0.5

    # separable zero-padded 25-tap gaussian blur (conv along H, then along W)
    blur_gray = mm(mm(G, gray), G)
    bleed = mm(mm(G, mask), G)                       # gaussian(self.mask)
    xg = blur_gray * pl.reciprocal(bleed + 1e-12, approx=True)

    # replicate-padded Sobel as matmuls:
    #   jsob = smooth_H([1,2,1]) of deriv_W([-1,0,1])
    #   isob = smooth_W([1,2,1]) of deriv_H([-1,0,1])
    jsob = mm(SR, mm(xg, DRT))
    isob = mm(mm(DR, xg), SR)

    abs_i = jnp.abs(isob)
    abs_j = jnp.abs(jsob)
    mag2 = isob * isob + jsob * jsob
    mag = jnp.sqrt(mag2 + EPS)

    # binary_erosion(mask, 3x3 ones, border_value=0): zero-padded 3x3 sum == 9
    mf = (mask != 0.0).astype(f32)
    nsum = mm(mm(T3, mf), T3)
    eroded = (nsum > 8.5) & (mag2 > 0.0)

    # 8 neighbor magnitudes via shift matmuls (zero fill is fine: they are only
    # consumed where `eroded` is true, which excludes the border).
    m_rp = mm(SH, mag)           # mag[r+1, c]
    m_rm = mm(SHT, mag)          # mag[r-1, c]
    m_cp = mm(mag, SHT)          # mag[r, c+1]
    m_cm = mm(mag, SH)           # mag[r, c-1]
    m_rp_cp = mm(m_rp, SHT)      # mag[r+1, c+1]
    m_rp_cm = mm(m_rp, SH)       # mag[r+1, c-1]
    m_rm_cp = mm(m_rm, SHT)      # mag[r-1, c+1]
    m_rm_cm = mm(m_rm, SH)       # mag[r-1, c-1]

    ip = isob >= 0.0
    im = isob <= 0.0
    jp = jsob >= 0.0
    jm = jsob <= 0.0
    a_ge = abs_i >= abs_j
    a_le = abs_i <= abs_j
    same_sign = (ip & jp) | (im & jm)    # hoisted: shared by 0-45 / 45-90
    diff_sign = (im & jp) | (ip & jm)    # hoisted: shared by 90-135 / 135-180

    lm = jnp.zeros((N, N), f32)

    # ---- 0-45 deg ----
    pts = eroded & same_sign & a_ge
    w = abs_j * pl.reciprocal(abs_i + EPS, approx=True)
    c_plus = (m_rp_cp * w + m_rp * (1.0 - w)) <= mag
    # NOTE: intentionally reproduces the literal `c2 * w + 1 * (1 - w)` of the
    # reference module (its c_minus uses the constant 1 instead of c1).
    c_minus = (m_rm_cm * w + (1.0 - w)) <= mag
    lm = jnp.where(pts, (c_plus & c_minus).astype(f32), lm)

    # ---- 45-90 deg ----
    pts = eroded & same_sign & a_le
    w = abs_i * pl.reciprocal(jnp.where(pts, abs_j, 1.0), approx=True)
    c_plus = (m_rp_cp * w + m_cp * (1.0 - w)) <= mag
    c_minus = (m_rm_cm * w + m_cm * (1.0 - w)) <= mag
    lm = jnp.where(pts, (c_plus & c_minus).astype(f32), lm)

    # ---- 90-135 deg ----
    pts = eroded & diff_sign & a_le
    w = abs_i * pl.reciprocal(jnp.where(pts, abs_j, 1.0), approx=True)
    c_plus = (m_rm_cp * w + m_cp * (1.0 - w)) <= mag
    c_minus = (m_rp_cm * w + m_cm * (1.0 - w)) <= mag
    lm = jnp.where(pts, (c_plus & c_minus).astype(f32), lm)

    # ---- 135-180 deg ----
    pts = eroded & diff_sign & a_ge
    w = abs_j * pl.reciprocal(jnp.where(pts, abs_i, 1.0), approx=True)
    c_plus = (m_rm_cp * w + m_rm * (1.0 - w)) <= mag
    c_minus = (m_rp_cm * w + m_rp * (1.0 - w)) <= mag
    lm = jnp.where(pts, (c_plus & c_minus).astype(f32), lm)

    is_lm = lm == 1.0
    high_f = (is_lm & (mag >= HIGH_T)).astype(f32)
    low_f = (is_lm & (mag >= LOW_T)).astype(f32)

    # Hysteresis: keep 8-connected components of `low` containing a `high`
    # pixel == geodesic dilation of `high` constrained to `low`. Fused here so
    # nothing round-trips through HBM and there is no per-step XLA dispatch.
    # `low` is zero on the whole border (erosion with border_value=0), so the
    # zero-fill T3 dilation is exact for all interior pixels.
    # TODO(synk): fixed 2*(H+W) trip count bounds typical propagation distance;
    # a pathological serpentine component could need up to H*W dilation steps.
    def body(_, cur):
        grown = mm(mm(T3, cur), T3)          # 3x3 dilation via neighborhood sum
        return jnp.where(grown > 0.5, low_f, 0.0)

    mask_final = lax.fori_loop(0, HYST_ITERS, body, high_f)

    # torch: magnitude = mask_final + magnitude - magnitude.detach() (forward
    # value == mask_final), then (magnitude - 0.5) / 0.5.
    out_ref[...] = mask_final * 2.0 - 1.0


def cifarnet_forward(x, mats, mask_param):
    # x: [1, 3, 32, 32] float32 (the module asserts batch == 1)
    planes = x[0]                            # [3, 32, 32]
    out = pl.pallas_call(
        canny_kernel,
        out_shape=jax.ShapeDtypeStruct((N, N), jnp.float32),
        in_specs=[pl.BlockSpec(memory_space=pltpu.MemorySpace.VMEM)] * 3,
        out_specs=pl.BlockSpec(memory_space=pltpu.MemorySpace.VMEM),
    )(planes, mats, mask_param)
    return out[None, None, :, :]             # [1, 1, 32, 32]


if __name__ == "__main__":
    key = jax.random.PRNGKey(0)
    x = jax.random.normal(key, (1, 3, N, N), dtype=jnp.float32)

    mats = _build_matrices()                          # constant operator stack
    mask_param = jnp.ones((N, N), jnp.float32)        # nn.Parameter(ones(1,1,32,32))

    out = jax.jit(cifarnet_forward)(x, mats, mask_param)
    out = jax.block_until_ready(out)
    assert out.shape == (1, 1, N, N) and out.dtype == jnp.float32
    print("KERNEL_OK")
</pallas_src>

<mosaic_0001>
module attributes {stable_mosaic.version = 11 : i64} {
  func.func @canny_kernel(%arg0: memref<3x32x32xf32, #tpu.memory_space<vmem>>, %arg1: memref<7x32x32xf32, #tpu.memory_space<vmem>>, %arg2: memref<32x32xf32, #tpu.memory_space<vmem>>, %arg3: memref<32x32xf32, #tpu.memory_space<vmem>>) attributes {dimension_semantics = [], scalar_prefetch = 0 : i64, scratch_operands = 0 : i64, tpu.core_type = #tpu.core_type<tc>} {
    %c0 = arith.constant 0 : index
    %c0_0 = arith.constant 0 : index
    %c0_1 = arith.constant 0 : index
    %0 = vector.load %arg1[%c0, %c0_0, %c0_1] : memref<7x32x32xf32, #tpu.memory_space<vmem>>, vector<1x32x32xf32>
    %1 = vector.shape_cast %0 : vector<1x32x32xf32> to vector<32x32xf32>
    %c1 = arith.constant 1 : index
    %c0_2 = arith.constant 0 : index
    %c0_3 = arith.constant 0 : index
    %2 = vector.load %arg1[%c1, %c0_2, %c0_3] : memref<7x32x32xf32, #tpu.memory_space<vmem>>, vector<1x32x32xf32>
    %3 = vector.shape_cast %2 : vector<1x32x32xf32> to vector<32x32xf32>
    %c2 = arith.constant 2 : index
    %c0_4 = arith.constant 0 : index
    %c0_5 = arith.constant 0 : index
    %4 = vector.load %arg1[%c2, %c0_4, %c0_5] : memref<7x32x32xf32, #tpu.memory_space<vmem>>, vector<1x32x32xf32>
    %5 = vector.shape_cast %4 : vector<1x32x32xf32> to vector<32x32xf32>
    %c3 = arith.constant 3 : index
    %c0_6 = arith.constant 0 : index
    %c0_7 = arith.constant 0 : index
    %6 = vector.load %arg1[%c3, %c0_6, %c0_7] : memref<7x32x32xf32, #tpu.memory_space<vmem>>, vector<1x32x32xf32>
    %7 = vector.shape_cast %6 : vector<1x32x32xf32> to vector<32x32xf32>
    %c4 = arith.constant 4 : index
    %c0_8 = arith.constant 0 : index
    %c0_9 = arith.constant 0 : index
    %8 = vector.load %arg1[%c4, %c0_8, %c0_9] : memref<7x32x32xf32, #tpu.memory_space<vmem>>, vector<1x32x32xf32>
    %9 = vector.shape_cast %8 : vector<1x32x32xf32> to vector<32x32xf32>
    %c5 = arith.constant 5 : index
    %c0_10 = arith.constant 0 : index
    %c0_11 = arith.constant 0 : index
    %10 = vector.load %arg1[%c5, %c0_10, %c0_11] : memref<7x32x32xf32, #tpu.memory_space<vmem>>, vector<1x32x32xf32>
    %11 = vector.shape_cast %10 : vector<1x32x32xf32> to vector<32x32xf32>
    %c6 = arith.constant 6 : index
    %c0_12 = arith.constant 0 : index
    %c0_13 = arith.constant 0 : index
    %12 = vector.load %arg1[%c6, %c0_12, %c0_13] : memref<7x32x32xf32, #tpu.memory_space<vmem>>, vector<1x32x32xf32>
    %13 = vector.shape_cast %12 : vector<1x32x32xf32> to vector<32x32xf32>
    %c0_14 = arith.constant 0 : index
    %c0_15 = arith.constant 0 : index
    %14 = vector.load %arg2[%c0_14, %c0_15] : memref<32x32xf32, #tpu.memory_space<vmem>>, vector<32x32xf32>
    %c0_16 = arith.constant 0 : index
    %c0_17 = arith.constant 0 : index
    %c0_18 = arith.constant 0 : index
    %15 = vector.load %arg0[%c0_16, %c0_17, %c0_18] : memref<3x32x32xf32, #tpu.memory_space<vmem>>, vector<1x32x32xf32>
    %16 = vector.shape_cast %15 : vector<1x32x32xf32> to vector<32x32xf32>
    %c1_19 = arith.constant 1 : index
    %c0_20 = arith.constant 0 : index
    %c0_21 = arith.constant 0 : index
    %17 = vector.load %arg0[%c1_19, %c0_20, %c0_21] : memref<3x32x32xf32, #tpu.memory_space<vmem>>, vector<1x32x32xf32>
    %18 = vector.shape_cast %17 : vector<1x32x32xf32> to vector<32x32xf32>
    %19 = arith.addf %16, %18 : vector<32x32xf32>
    %c2_22 = arith.constant 2 : index
    %c0_23 = arith.constant 0 : index
    %c0_24 = arith.constant 0 : index
    %20 = vector.load %arg0[%c2_22, %c0_23, %c0_24] : memref<3x32x32xf32, #tpu.memory_space<vmem>>, vector<1x32x32xf32>
    %21 = vector.shape_cast %20 : vector<1x32x32xf32> to vector<32x32xf32>
    %22 = arith.addf %19, %21 : vector<32x32xf32>
    %cst = arith.constant 0.166666672 : f32
    %23 = vector.broadcast %cst : f32 to vector<32x32xf32>
    %24 = arith.mulf %22, %23 : vector<32x32xf32>
    %cst_25 = arith.constant 5.000000e-01 : f32
    %25 = vector.broadcast %cst_25 : f32 to vector<32x32xf32>
    %26 = arith.addf %24, %25 : vector<32x32xf32>
    %cst_26 = arith.constant dense<0.000000e+00> : vector<32x32xf32>
    %27 = tpu.matmul %1, %26, %cst_26 {dimension_numbers = #tpu.dot_dimension_numbers<[1], [0], [0], [1], [0, 0, 1, 1], [], []>} : vector<32x32xf32>, vector<32x32xf32>, vector<32x32xf32> -> vector<32x32xf32>
    %cst_27 = arith.constant dense<0.000000e+00> : vector<32x32xf32>
    %28 = tpu.matmul %27, %1, %cst_27 {dimension_numbers = #tpu.dot_dimension_numbers<[1], [0], [0], [1], [0, 0, 1, 1], [], []>} : vector<32x32xf32>, vector<32x32xf32>, vector<32x32xf32> -> vector<32x32xf32>
    %cst_28 = arith.constant dense<0.000000e+00> : vector<32x32xf32>
    %29 = tpu.matmul %1, %14, %cst_28 {dimension_numbers = #tpu.dot_dimension_numbers<[1], [0], [0], [1], [0, 0, 1, 1], [], []>} : vector<32x32xf32>, vector<32x32xf32>, vector<32x32xf32> -> vector<32x32xf32>
    %cst_29 = arith.constant dense<0.000000e+00> : vector<32x32xf32>
    %30 = tpu.matmul %29, %1, %cst_29 {dimension_numbers = #tpu.dot_dimension_numbers<[1], [0], [0], [1], [0, 0, 1, 1], [], []>} : vector<32x32xf32>, vector<32x32xf32>, vector<32x32xf32> -> vector<32x32xf32>
    %cst_30 = arith.constant 9.99999996E-13 : f32
    %31 = vector.broadcast %cst_30 : f32 to vector<32x32xf32>
    %32 = arith.addf %30, %31 : vector<32x32xf32>
    %33 = tpu.reciprocal %32 {approx = true} : vector<32x32xf32> -> vector<32x32xf32>
    %34 = arith.mulf %28, %33 : vector<32x32xf32>
    %cst_31 = arith.constant dense<0.000000e+00> : vector<32x32xf32>
    %35 = tpu.matmul %34, %7, %cst_31 {dimension_numbers = #tpu.dot_dimension_numbers<[1], [0], [0], [1], [0, 0, 1, 1], [], []>} : vector<32x32xf32>, vector<32x32xf32>, vector<32x32xf32> -> vector<32x32xf32>
    %cst_32 = arith.constant dense<0.000000e+00> : vector<32x32xf32>
    %36 = tpu.matmul %3, %35, %cst_32 {dimension_numbers = #tpu.dot_dimension_numbers<[1], [0], [0], [1], [0, 0, 1, 1], [], []>} : vector<32x32xf32>, vector<32x32xf32>, vector<32x32xf32> -> vector<32x32xf32>
    %cst_33 = arith.constant dense<0.000000e+00> : vector<32x32xf32>
    %37 = tpu.matmul %5, %34, %cst_33 {dimension_numbers = #tpu.dot_dimension_numbers<[1], [0], [0], [1], [0, 0, 1, 1], [], []>} : vector<32x32xf32>, vector<32x32xf32>, vector<32x32xf32> -> vector<32x32xf32>
    %cst_34 = arith.constant dense<0.000000e+00> : vector<32x32xf32>
    %38 = tpu.matmul %37, %3, %cst_34 {dimension_numbers = #tpu.dot_dimension_numbers<[1], [0], [0], [1], [0, 0, 1, 1], [], []>} : vector<32x32xf32>, vector<32x32xf32>, vector<32x32xf32> -> vector<32x32xf32>
    %39 = math.absf %38 : vector<32x32xf32>
    %40 = math.absf %36 : vector<32x32xf32>
    %41 = arith.mulf %38, %38 : vector<32x32xf32>
    %42 = arith.mulf %36, %36 : vector<32x32xf32>
    %43 = arith.addf %41, %42 : vector<32x32xf32>
    %cst_35 = arith.constant 9.99999971E-10 : f32
    %44 = vector.broadcast %cst_35 : f32 to vector<32x32xf32>
    %45 = arith.addf %43, %44 : vector<32x32xf32>
    %46 = math.sqrt %45 : vector<32x32xf32>
    %cst_36 = arith.constant 0.000000e+00 : f32
    %47 = vector.broadcast %cst_36 : f32 to vector<32x32xf32>
    %48 = arith.cmpf one, %14, %47 : vector<32x32xf32>
    %49 = arith.extui %48 : vector<32x32xi1> to vector<32x32xi32>
    %50 = arith.sitofp %49 : vector<32x32xi32> to vector<32x32xf32>
    %cst_37 = arith.constant dense<0.000000e+00> : vector<32x32xf32>
    %51 = tpu.matmul %13, %50, %cst_37 {dimension_numbers = #tpu.dot_dimension_numbers<[1], [0], [0], [1], [0, 0, 1, 1], [], []>} : vector<32x32xf32>, vector<32x32xf32>, vector<32x32xf32> -> vector<32x32xf32>
    %cst_38 = arith.constant dense<0.000000e+00> : vector<32x32xf32>
    %52 = tpu.matmul %51, %13, %cst_38 {dimension_numbers = #tpu.dot_dimension_numbers<[1], [0], [0], [1], [0, 0, 1, 1], [], []>} : vector<32x32xf32>, vector<32x32xf32>, vector<32x32xf32> -> vector<32x32xf32>
    %cst_39 = arith.constant 8.500000e+00 : f32
    %53 = vector.broadcast %cst_39 : f32 to vector<32x32xf32>
    %54 = arith.cmpf ogt, %52, %53 : vector<32x32xf32>
    %cst_40 = arith.constant 0.000000e+00 : f32
    %55 = vector.broadcast %cst_40 : f32 to vector<32x32xf32>
    %56 = arith.cmpf ogt, %43, %55 : vector<32x32xf32>
    %57 = arith.andi %54, %56 : vector<32x32xi1>
    %cst_41 = arith.constant dense<0.000000e+00> : vector<32x32xf32>
    %58 = tpu.matmul %9, %46, %cst_41 {dimension_numbers = #tpu.dot_dimension_numbers<[1], [0], [0], [1], [0, 0, 1, 1], [], []>} : vector<32x32xf32>, vector<32x32xf32>, vector<32x32xf32> -> vector<32x32xf32>
    %cst_42 = arith.constant dense<0.000000e+00> : vector<32x32xf32>
    %59 = tpu.matmul %11, %46, %cst_42 {dimension_numbers = #tpu.dot_dimension_numbers<[1], [0], [0], [1], [0, 0, 1, 1], [], []>} : vector<32x32xf32>, vector<32x32xf32>, vector<32x32xf32> -> vector<32x32xf32>
    %cst_43 = arith.constant dense<0.000000e+00> : vector<32x32xf32>
    %60 = tpu.matmul %46, %11, %cst_43 {dimension_numbers = #tpu.dot_dimension_numbers<[1], [0], [0], [1], [0, 0, 1, 1], [], []>} : vector<32x32xf32>, vector<32x32xf32>, vector<32x32xf32> -> vector<32x32xf32>
    %cst_44 = arith.constant dense<0.000000e+00> : vector<32x32xf32>
    %61 = tpu.matmul %46, %9, %cst_44 {dimension_numbers = #tpu.dot_dimension_numbers<[1], [0], [0], [1], [0, 0, 1, 1], [], []>} : vector<32x32xf32>, vector<32x32xf32>, vector<32x32xf32> -> vector<32x32xf32>
    %cst_45 = arith.constant dense<0.000000e+00> : vector<32x32xf32>
    %62 = tpu.matmul %58, %11, %cst_45 {dimension_numbers = #tpu.dot_dimension_numbers<[1], [0], [0], [1], [0, 0, 1, 1], [], []>} : vector<32x32xf32>, vector<32x32xf32>, vector<32x32xf32> -> vector<32x32xf32>
    %cst_46 = arith.constant dense<0.000000e+00> : vector<32x32xf32>
    %63 = tpu.matmul %58, %9, %cst_46 {dimension_numbers = #tpu.dot_dimension_numbers<[1], [0], [0], [1], [0, 0, 1, 1], [], []>} : vector<32x32xf32>, vector<32x32xf32>, vector<32x32xf32> -> vector<32x32xf32>
    %cst_47 = arith.constant dense<0.000000e+00> : vector<32x32xf32>
    %64 = tpu.matmul %59, %11, %cst_47 {dimension_numbers = #tpu.dot_dimension_numbers<[1], [0], [0], [1], [0, 0, 1, 1], [], []>} : vector<32x32xf32>, vector<32x32xf32>, vector<32x32xf32> -> vector<32x32xf32>
    %cst_48 = arith.constant dense<0.000000e+00> : vector<32x32xf32>
    %65 = tpu.matmul %59, %9, %cst_48 {dimension_numbers = #tpu.dot_dimension_numbers<[1], [0], [0], [1], [0, 0, 1, 1], [], []>} : vector<32x32xf32>, vector<32x32xf32>, vector<32x32xf32> -> vector<32x32xf32>
    %cst_49 = arith.constant 0.000000e+00 : f32
    %66 = vector.broadcast %cst_49 : f32 to vector<32x32xf32>
    %67 = arith.cmpf oge, %38, %66 : vector<32x32xf32>
    %cst_50 = arith.constant 0.000000e+00 : f32
    %68 = vector.broadcast %cst_50 : f32 to vector<32x32xf32>
    %69 = arith.cmpf ole, %38, %68 : vector<32x32xf32>
    %cst_51 = arith.constant 0.000000e+00 : f32
    %70 = vector.broadcast %cst_51 : f32 to vector<32x32xf32>
    %71 = arith.cmpf oge, %36, %70 : vector<32x32xf32>
    %cst_52 = arith.constant 0.000000e+00 : f32
    %72 = vector.broadcast %cst_52 : f32 to vector<32x32xf32>
    %73 = arith.cmpf ole, %36, %72 : vector<32x32xf32>
    %74 = arith.cmpf oge, %39, %40 : vector<32x32xf32>
    %75 = arith.cmpf ole, %39, %40 : vector<32x32xf32>
    %76 = arith.andi %67, %71 : vector<32x32xi1>
    %77 = arith.andi %69, %73 : vector<32x32xi1>
    %78 = arith.ori %76, %77 : vector<32x32xi1>
    %79 = arith.andi %69, %71 : vector<32x32xi1>
    %80 = arith.andi %67, %73 : vector<32x32xi1>
    %81 = arith.ori %79, %80 : vector<32x32xi1>
    %cst_53 = arith.constant 0.000000e+00 : f32
    %82 = vector.broadcast %cst_53 : f32 to vector<32x32xf32>
    %83 = arith.andi %57, %78 : vector<32x32xi1>
    %84 = arith.andi %83, %74 : vector<32x32xi1>
    %cst_54 = arith.constant 9.99999971E-10 : f32
    %85 = vector.broadcast %cst_54 : f32 to vector<32x32xf32>
    %86 = arith.addf %39, %85 : vector<32x32xf32>
    %87 = tpu.reciprocal %86 {approx = true} : vector<32x32xf32> -> vector<32x32xf32>
    %88 = arith.mulf %40, %87 : vector<32x32xf32>
    %89 = arith.mulf %62, %88 : vector<32x32xf32>
    %cst_55 = arith.constant 1.000000e+00 : f32
    %90 = vector.broadcast %cst_55 : f32 to vector<32x32xf32>
    %91 = arith.subf %90, %88 : vector<32x32xf32>
    %92 = arith.mulf %58, %91 : vector<32x32xf32>
    %93 = arith.addf %89, %92 : vector<32x32xf32>
    %94 = arith.cmpf ole, %93, %46 : vector<32x32xf32>
    %95 = arith.mulf %65, %88 : vector<32x32xf32>
    %cst_56 = arith.constant 1.000000e+00 : f32
    %96 = vector.broadcast %cst_56 : f32 to vector<32x32xf32>
    %97 = arith.subf %96, %88 : vector<32x32xf32>
    %98 = arith.addf %95, %97 : vector<32x32xf32>
    %99 = arith.cmpf ole, %98, %46 : vector<32x32xf32>
    %100 = arith.andi %94, %99 : vector<32x32xi1>
    %101 = arith.extui %100 : vector<32x32xi1> to vector<32x32xi32>
    %102 = arith.sitofp %101 : vector<32x32xi32> to vector<32x32xf32>
    %103 = arith.select %84, %102, %82 : vector<32x32xi1>, vector<32x32xf32>
    %104 = arith.andi %57, %78 : vector<32x32xi1>
    %105 = arith.andi %104, %75 : vector<32x32xi1>
    %cst_57 = arith.constant 1.000000e+00 : f32
    %106 = vector.broadcast %cst_57 : f32 to vector<32x32xf32>
    %107 = arith.select %105, %40, %106 : vector<32x32xi1>, vector<32x32xf32>
    %108 = tpu.reciprocal %107 {approx = true} : vector<32x32xf32> -> vector<32x32xf32>
    %109 = arith.mulf %39, %108 : vector<32x32xf32>
    %110 = arith.mulf %62, %109 : vector<32x32xf32>
    %cst_58 = arith.constant 1.000000e+00 : f32
    %111 = vector.broadcast %cst_58 : f32 to vector<32x32xf32>
    %112 = arith.subf %111, %109 : vector<32x32xf32>
    %113 = arith.mulf %60, %112 : vector<32x32xf32>
    %114 = arith.addf %110, %113 : vector<32x32xf32>
    %115 = arith.cmpf ole, %114, %46 : vector<32x32xf32>
    %116 = arith.mulf %65, %109 : vector<32x32xf32>
    %cst_59 = arith.constant 1.000000e+00 : f32
    %117 = vector.broadcast %cst_59 : f32 to vector<32x32xf32>
    %118 = arith.subf %117, %109 : vector<32x32xf32>
    %119 = arith.mulf %61, %118 : vector<32x32xf32>
    %120 = arith.addf %116, %119 : vector<32x32xf32>
    %121 = arith.cmpf ole, %120, %46 : vector<32x32xf32>
    %122 = arith.andi %115, %121 : vector<32x32xi1>
    %123 = arith.extui %122 : vector<32x32xi1> to vector<32x32xi32>
    %124 = arith.sitofp %123 : vector<32x32xi32> to vector<32x32xf32>
    %125 = arith.select %105, %124, %103 : vector<32x32xi1>, vector<32x32xf32>
    %126 = arith.andi %57, %81 : vector<32x32xi1>
    %127 = arith.andi %126, %75 : vector<32x32xi1>
    %cst_60 = arith.constant 1.000000e+00 : f32
    %128 = vector.broadcast %cst_60 : f32 to vector<32x32xf32>
    %129 = arith.select %127, %40, %128 : vector<32x32xi1>, vector<32x32xf32>
    %130 = tpu.reciprocal %129 {approx = true} : vector<32x32xf32> -> vector<32x32xf32>
    %131 = arith.mulf %39, %130 : vector<32x32xf32>
    %132 = arith.mulf %64, %131 : vector<32x32xf32>
    %cst_61 = arith.constant 1.000000e+00 : f32
    %133 = vector.broadcast %cst_61 : f32 to vector<32x32xf32>
    %134 = arith.subf %133, %131 : vector<32x32xf32>
    %135 = arith.mulf %60, %134 : vector<32x32xf32>
    %136 = arith.addf %132, %135 : vector<32x32xf32>
    %137 = arith.cmpf ole, %136, %46 : vector<32x32xf32>
    %138 = arith.mulf %63, %131 : vector<32x32xf32>
    %cst_62 = arith.constant 1.000000e+00 : f32
    %139 = vector.broadcast %cst_62 : f32 to vector<32x32xf32>
    %140 = arith.subf %139, %131 : vector<32x32xf32>
    %141 = arith.mulf %61, %140 : vector<32x32xf32>
    %142 = arith.addf %138, %141 : vector<32x32xf32>
    %143 = arith.cmpf ole, %142, %46 : vector<32x32xf32>
    %144 = arith.andi %137, %143 : vector<32x32xi1>
    %145 = arith.extui %144 : vector<32x32xi1> to vector<32x32xi32>
    %146 = arith.sitofp %145 : vector<32x32xi32> to vector<32x32xf32>
    %147 = arith.select %127, %146, %125 : vector<32x32xi1>, vector<32x32xf32>
    %148 = arith.andi %57, %81 : vector<32x32xi1>
    %149 = arith.andi %148, %74 : vector<32x32xi1>
    %cst_63 = arith.constant 1.000000e+00 : f32
    %150 = vector.broadcast %cst_63 : f32 to vector<32x32xf32>
    %151 = arith.select %149, %39, %150 : vector<32x32xi1>, vector<32x32xf32>
    %152 = tpu.reciprocal %151 {approx = true} : vector<32x32xf32> -> vector<32x32xf32>
    %153 = arith.mulf %40, %152 : vector<32x32xf32>
    %154 = arith.mulf %64, %153 : vector<32x32xf32>
    %cst_64 = arith.constant 1.000000e+00 : f32
    %155 = vector.broadcast %cst_64 : f32 to vector<32x32xf32>
    %156 = arith.subf %155, %153 : vector<32x32xf32>
    %157 = arith.mulf %59, %156 : vector<32x32xf32>
    %158 = arith.addf %154, %157 : vector<32x32xf32>
    %159 = arith.cmpf ole, %158, %46 : vector<32x32xf32>
    %160 = arith.mulf %63, %153 : vector<32x32xf32>
    %cst_65 = arith.constant 1.000000e+00 : f32
    %161 = vector.broadcast %cst_65 : f32 to vector<32x32xf32>
    %162 = arith.subf %161, %153 : vector<32x32xf32>
    %163 = arith.mulf %58, %162 : vector<32x32xf32>
    %164 = arith.addf %160, %163 : vector<32x32xf32>
    %165 = arith.cmpf ole, %164, %46 : vector<32x32xf32>
    %166 = arith.andi %159, %165 : vector<32x32xi1>
    %167 = arith.extui %166 : vector<32x32xi1> to vector<32x32xi32>
    %168 = arith.sitofp %167 : vector<32x32xi32> to vector<32x32xf32>
    %169 = arith.select %149, %168, %147 : vector<32x32xi1>, vector<32x32xf32>
    %cst_66 = arith.constant 1.000000e+00 : f32
    %170 = vector.broadcast %cst_66 : f32 to vector<32x32xf32>
    %171 = arith.cmpf oeq, %169, %170 : vector<32x32xf32>
    %cst_67 = arith.constant 2.000000e-01 : f32
    %172 = vector.broadcast %cst_67 : f32 to vector<32x32xf32>
    %173 = arith.cmpf oge, %46, %172 : vector<32x32xf32>
    %174 = arith.andi %171, %173 : vector<32x32xi1>
    %175 = arith.extui %174 : vector<32x32xi1> to vector<32x32xi32>
    %176 = arith.sitofp %175 : vector<32x32xi32> to vector<32x32xf32>
    %cst_68 = arith.constant 1.000000e-01 : f32
    %177 = vector.broadcast %cst_68 : f32 to vector<32x32xf32>
    %178 = arith.cmpf oge, %46, %177 : vector<32x32xf32>
    %179 = arith.andi %171, %178 : vector<32x32xi1>
    %180 = arith.extui %179 : vector<32x32xi1> to vector<32x32xi32>
    %181 = arith.sitofp %180 : vector<32x32xi32> to vector<32x32xf32>
    %c0_i32 = arith.constant 0 : i32
    %c128_i32 = arith.constant 128 : i32
    %182 = arith.addi %c0_i32, %c128_i32 : i32
    %c1_i32 = arith.constant 1 : i32
    %183 = scf.for %arg4 = %c0_i32 to %182 step %c1_i32 iter_args(%arg5 = %176) -> (vector<32x32xf32>)  : i32 {
      %cst_73 = arith.constant dense<0.000000e+00> : vector<32x32xf32>
      %189 = tpu.matmul %13, %arg5, %cst_73 {dimension_numbers = #tpu.dot_dimension_numbers<[1], [0], [0], [1], [0, 0, 1, 1], [], []>} : vector<32x32xf32>, vector<32x32xf32>, vector<32x32xf32> -> vector<32x32xf32>
      %cst_74 = arith.constant dense<0.000000e+00> : vector<32x32xf32>
      %190 = tpu.matmul %189, %13, %cst_74 {dimension_numbers = #tpu.dot_dimension_numbers<[1], [0], [0], [1], [0, 0, 1, 1], [], []>} : vector<32x32xf32>, vector<32x32xf32>, vector<32x32xf32> -> vector<32x32xf32>
      %cst_75 = arith.constant 5.000000e-01 : f32
      %191 = vector.broadcast %cst_75 : f32 to vector<32x32xf32>
      %192 = arith.cmpf ogt, %190, %191 : vector<32x32xf32>
      %cst_76 = arith.constant 0.000000e+00 : f32
      %193 = vector.broadcast %cst_76 : f32 to vector<32x32xf32>
      %194 = arith.select %192, %181, %193 : vector<32x32xi1>, vector<32x32xf32>
      scf.yield %194 : vector<32x32xf32>
    }
    %cst_69 = arith.constant 2.000000e+00 : f32
    %184 = vector.broadcast %cst_69 : f32 to vector<32x32xf32>
    %185 = arith.mulf %183, %184 : vector<32x32xf32>
    %cst_70 = arith.constant 1.000000e+00 : f32
    %186 = vector.broadcast %cst_70 : f32 to vector<32x32xf32>
    %187 = arith.subf %185, %186 : vector<32x32xf32>
    %c0_71 = arith.constant 0 : index
    %c0_72 = arith.constant 0 : index
    %188 = vector.load %arg3[%c0_71, %c0_72] : memref<32x32xf32, #tpu.memory_space<vmem>>, vector<32x32xf32>
    tpu.vector_store %arg3[%c0_71, %c0_72], %187 {strides = array<i32>} : memref<32x32xf32, #tpu.memory_space<vmem>>, vector<32x32xf32>,
    return
  }
}

</mosaic_0001>

<llo_original>
// kernel: cifarnet_forward.1
$region0: #{cifarnet_forward.1}
  #allocation0 [shape = 'u32[]', space=smem, size = 0x4, offset = 0x4, fixed_abs, tag = 'smem constant byte address 0x4 - core index']
  #allocation1 [shape = 'u32[144,128]{1,0:T(1,128)}', space=vmem, size = 0x12000, scoped, tag = 'internal scratch']
  %s0 = inlined_call_operand.hbm [shape: f32[3,32,32], index: 0, kind: input, shape index: {}]
  %s1 = inlined_call_operand.hbm [shape: f32[7,32,32], index: 1, kind: input, shape index: {}]
  %s2 = inlined_call_operand.hbm [shape: f32[32,32], index: 2, kind: input, shape index: {}]
  %s3 = inlined_call_operand.hbm [shape: f32[32,32], index: 3, kind: output, shape index: {}]
  %s4 = sld [smem:[#allocation0]]
  $region41: #{cifarnet_forward.1} parent=0
    _
  %s6 = ssub.s32 1, %s4
  %s7 = scalar_select 0, %s6, %s4
  $region1: #{cifarnet_forward.1} parent=0
    #allocation2 [shape = 'u8[49152]{0}', space=vmem, size = 0xc000, scoped, tag = 'input window, operand 0, single buffered']
    #allocation3 [shape = 's32[1]{0}', space=sflag, size = 0x4, scoped, tag = 'scoped memory for cifarnet_forward.1']
    #allocation4 [shape = 's32[1]{0}', space=sflag, size = 0x4, scoped, tag = 'scoped memory for cifarnet_forward.1']
    #allocation5 [shape = 'u8[114688]{0}', space=vmem, size = 0x1c000, scoped, tag = 'input window, operand 1, single buffered']
    #allocation6 [shape = 's32[1]{0}', space=sflag, size = 0x4, scoped, tag = 'scoped memory for cifarnet_forward.1']
    #allocation7 [shape = 'u8[16384]{0}', space=vmem, size = 0x4000, scoped, tag = 'input window, operand 2, single buffered']
    #allocation8 [shape = 'u8[16384]{0}', space=vmem, size = 0x4000, scoped, tag = 'output window, operand 0, single buffered']
    %8 = vsyncpa [#allocation3], 0
    %9 = vsyncpa [#allocation6], 0
    %10 = vsyncpa [#allocation4], 0
    // Predicated region
    $region2: #{cifarnet_forward.1} parent=1 // pred_check
      _
    $region3: #{cifarnet_forward.1} parent=1 // pred_check_branch
      %12 = sbr.rel (0) target = $region5
    $region4: #{cifarnet_forward.1} parent=1 // pred_region
      %s14 = ssub.s32 1536, 1536
      %15 = vsyncadd [#allocation3], %s14
      %s16 = sshll.u32 [#allocation2], 4
      %s17 = int_to_ptr.vmem [resolvable:$true] %s16
      %22 = dma.hbm_to_vmem [thread:$0]  %s0, 1536, %s17, [#allocation3], 128, 128, 8
    $region5: #{cifarnet_forward.1} parent=1 // pred_fallthru
      _
    // Predicated region
    $region6: #{cifarnet_forward.1} parent=1 // pred_check
      _
    $region7: #{cifarnet_forward.1} parent=1 // pred_check_branch
      %24 = sbr.rel (0) target = $region9
    $region8: #{cifarnet_forward.1} parent=1 // pred_region
      %s26 = ssub.s32 3584, 3584
      %27 = vsyncadd [#allocation6], %s26
      %s28 = sshll.u32 [#allocation5], 4
      %s29 = int_to_ptr.vmem [resolvable:$true] %s28
      %34 = dma.hbm_to_vmem [thread:$0]  %s1, 3584, %s29, [#allocation6], 128, 128, 8
    $region9: #{cifarnet_forward.1} parent=1 // pred_fallthru
      _
    // Predicated region
    $region10: #{cifarnet_forward.1} parent=1 // pred_check
      _
    $region11: #{cifarnet_forward.1} parent=1 // pred_check_branch
      %36 = sbr.rel (0) target = $region13
    $region12: #{cifarnet_forward.1} parent=1 // pred_region
      %s38 = ssub.s32 512, 512
      %39 = vsyncadd [#allocation6], %s38
      %s40 = sshll.u32 [#allocation7], 4
      %s41 = int_to_ptr.vmem [resolvable:$true] %s40
      %46 = dma.hbm_to_vmem [thread:$0]  %s2, 512, %s41, [#allocation6], 128, 128, 8
    $region13: #{cifarnet_forward.1} parent=1 // pred_fallthru
      _
    // Predicated region
    $region14: #{cifarnet_forward.1} parent=1 // pred_check
      _
    $region15: #{cifarnet_forward.1} parent=1 // pred_check_branch
      %48 = sbr.rel (0) target = $region17
    $region16: #{cifarnet_forward.1} parent=1 // pred_region
      %49 = dma.done [#allocation3], 1536
    $region17: #{cifarnet_forward.1} parent=1 // pred_fallthru
      _
    // Predicated region
    $region18: #{cifarnet_forward.1} parent=1 // pred_check
      _
    $region19: #{cifarnet_forward.1} parent=1 // pred_check_branch
      %51 = sbr.rel (0) target = $region21
    $region20: #{cifarnet_forward.1} parent=1 // pred_region
      %52 = dma.done [#allocation6], 3584
    $region21: #{cifarnet_forward.1} parent=1 // pred_fallthru
      _
    // Predicated region
    $region22: #{cifarnet_forward.1} parent=1 // pred_check
      _
    $region23: #{cifarnet_forward.1} parent=1 // pred_check_branch
      %54 = sbr.rel (0) target = $region25
    $region24: #{cifarnet_forward.1} parent=1 // pred_region
      %55 = dma.done [#allocation6], 512
    $region25: #{cifarnet_forward.1} parent=1 // pred_fallthru
      _
    %v56 = vld [vmem:[#allocation5] sm:$0xff]
    %v57 = vld [vmem:[#allocation5 + $0x8] sm:$0xff]
    %v58 = vld [vmem:[#allocation5 + $0x10] sm:$0xff]
    %v59 = vld [vmem:[#allocation5 + $0x18] sm:$0xff]
    %s60 = scalar_lea.vmem [#allocation5], 32
    %v61 = vld [vmem:[%s60] sm:$0xff]
    %v62 = vld [vmem:[%s60 + $0x8] sm:$0xff]
    %v63 = vld [vmem:[%s60 + $0x10] sm:$0xff]
    %v64 = vld [vmem:[%s60 + $0x18] sm:$0xff]
    %s65 = scalar_lea.vmem [#allocation5], 64
    %v66 = vld [vmem:[%s65] sm:$0xff]
    %v67 = vld [vmem:[%s65 + $0x8] sm:$0xff]
    %v68 = vld [vmem:[%s65 + $0x10] sm:$0xff]
    %v69 = vld [vmem:[%s65 + $0x18] sm:$0xff]
    %s70 = scalar_lea.vmem [#allocation5], 96
    %v71 = vld [vmem:[%s70] sm:$0xff]
    %v72 = vld [vmem:[%s70 + $0x8] sm:$0xff]
    %v73 = vld [vmem:[%s70 + $0x10] sm:$0xff]
    %v74 = vld [vmem:[%s70 + $0x18] sm:$0xff]
    %s75 = scalar_lea.vmem [#allocation5], 128
    %v76 = vld [vmem:[%s75] sm:$0xff]
    %v77 = vld [vmem:[%s75 + $0x8] sm:$0xff]
    %v78 = vld [vmem:[%s75 + $0x10] sm:$0xff]
    %v79 = vld [vmem:[%s75 + $0x18] sm:$0xff]
    %s80 = scalar_lea.vmem [#allocation5], 160
    %v81 = vld [vmem:[%s80] sm:$0xff]
    %v82 = vld [vmem:[%s80 + $0x8] sm:$0xff]
    %v83 = vld [vmem:[%s80 + $0x10] sm:$0xff]
    %v84 = vld [vmem:[%s80 + $0x18] sm:$0xff]
    %s85 = scalar_lea.vmem [#allocation5], 192
    %v86 = vld [vmem:[%s85] sm:$0xff]
    %v87 = vld [vmem:[%s85 + $0x8] sm:$0xff]
    %v88 = vld [vmem:[%s85 + $0x10] sm:$0xff]
    %v89 = vld [vmem:[%s85 + $0x18] sm:$0xff]
    %v90 = vld [vmem:[#allocation7] sm:$0xff]
    %v91 = vld [vmem:[#allocation7 + $0x8] sm:$0xff]
    %v92 = vld [vmem:[#allocation7 + $0x10] sm:$0xff]
    %v93 = vld [vmem:[#allocation7 + $0x18] sm:$0xff]
    %v94 = vld [vmem:[#allocation2] sm:$0xff]
    %v95 = vld [vmem:[#allocation2 + $0x8] sm:$0xff]
    %v96 = vld [vmem:[#allocation2 + $0x10] sm:$0xff]
    %v97 = vld [vmem:[#allocation2 + $0x18] sm:$0xff]
    %s98 = scalar_lea.vmem [#allocation2], 32
    %v99 = vld [vmem:[%s98] sm:$0xff]
    %v100 = vld [vmem:[%s98 + $0x8] sm:$0xff]
    %v101 = vld [vmem:[%s98 + $0x10] sm:$0xff]
    %v102 = vld [vmem:[%s98 + $0x18] sm:$0xff]
    %v103 = vadd.f32 %v94, %v99
    %v104 = vadd.f32 %v95, %v100
    %v105 = vadd.f32 %v96, %v101
    %v106 = vadd.f32 %v97, %v102
    %s107 = scalar_lea.vmem [#allocation2], 64
    %v108 = vld [vmem:[%s107] sm:$0xff]
    %v109 = vld [vmem:[%s107 + $0x8] sm:$0xff]
    %v110 = vld [vmem:[%s107 + $0x10] sm:$0xff]
    %v111 = vld [vmem:[%s107 + $0x18] sm:$0xff]
    %v112 = vadd.f32 %v103, %v108
    %v113 = vadd.f32 %v104, %v109
    %v114 = vadd.f32 %v105, %v110
    %v115 = vadd.f32 %v106, %v111
    %v116 = vmul.f32 %v112, 0.16666667
    %v117 = vmul.f32 %v113, 0.16666667
    %v118 = vmul.f32 %v114, 0.16666667
    %v119 = vmul.f32 %v115, 0.16666667
    %v120 = vadd.f32 %v116, 0.5
    %v121 = vadd.f32 %v117, 0.5
    %v122 = vadd.f32 %v118, 0.5
    %v123 = vadd.f32 %v119, 0.5
    %vm124 = vcmask 261120
    %v126 = vsel %vm124, %v56, 0
    %v129 = vsel %vm124, %v57, 0
    %v132 = vsel %vm124, %v58, 0
    %v135 = vsel %vm124, %v59, 0
    %137 = vmatprep.subr.mxu0 0.0
    %138 = vmatpush1.msra.mxu0 %v120
    %139 = vmatprep.subr.mxu0 0.0
    %140 = vmatpush1.msra.mxu0 %v121
    %141 = vmatprep.subr.mxu0 0.0
    %142 = vmatpush1.msra.mxu0 %v122
    %143 = vmatprep.subr.mxu0 0.0
    %144 = vmatpush1.msra.mxu0 %v123
    %145 = vmatprep.subr.mxu0 0.0
    %146 = vmatpush1.msra.mxu0 0.0
    %147 = vmatprep.subr.mxu0 0.0
    %148 = vmatpush1.msra.mxu0 0.0
    %149 = vmatprep.subr.mxu0 0.0
    %150 = vmatpush1.msra.mxu0 0.0
    %151 = vmatprep.subr.mxu0 0.0
    %152 = vmatpush1.msra.mxu0 0.0
    %153 = vmatprep.subr.mxu0 0.0
    %154 = vmatpush1.msra.mxu0 0.0
    %155 = vmatprep.subr.mxu0 0.0
    %156 = vmatpush1.msra.mxu0 0.0
    %157 = vmatprep.subr.mxu0 0.0
    %158 = vmatpush1.msra.mxu0 0.0
    %159 = vmatprep.subr.mxu0 0.0
    %160 = vmatpush1.msra.mxu0 0.0
    %161 = vmatprep.subr.mxu0 0.0
    %162 = vmatpush1.msra.mxu0 0.0
    %163 = vmatprep.subr.mxu0 0.0
    %164 = vmatpush1.msra.mxu0 0.0
    %165 = vmatprep.subr.mxu0 0.0
    %166 = vmatpush1.msra.mxu0 0.0
    %167 = vmatprep.subr.mxu0 0.0
    %168 = vmatpush1.msra.mxu0 0.0
    %169 = vmatprep.subr.mxu0 0.0
    %170 = vmatpush1.msra.mxu0 0.0
    %171 = vmatprep.subr.mxu0 0.0
    %172 = vmatpush1.msra.mxu0 0.0
    %173 = vmatprep.subr.mxu0 0.0
    %174 = vmatpush1.msra.mxu0 0.0
    %175 = vmatprep.subr.mxu0 0.0
    %176 = vmatpush1.msra.mxu0 0.0
    %177 = vmatprep.subr.mxu0 0.0
    %178 = vmatpush1.msra.mxu0 0.0
    %179 = vmatprep.subr.mxu0 0.0
    %180 = vmatpush1.msra.mxu0 0.0
    %181 = vmatprep.subr.mxu0 0.0
    %182 = vmatpush1.msra.mxu0 0.0
    %183 = vmatprep.subr.mxu0 0.0
    %184 = vmatpush1.msra.mxu0 0.0
    %185 = vmatprep.subr.mxu0 0.0
    %186 = vmatpush1.msra.mxu0 0.0
    %187 = vmatprep.subr.mxu0 0.0
    %188 = vmatpush1.msra.mxu0 0.0
    %189 = vmatprep.subr.mxu0 0.0
    %190 = vmatpush1.msra.mxu0 0.0
    %191 = vmatprep.subr.mxu0 0.0
    %192 = vmatpush1.msra.mxu0 0.0
    %193 = vmatprep.subr.mxu0 0.0
    %194 = vmatpush1.msra.mxu0 0.0
    %195 = vmatprep.subr.mxu0 0.0
    %196 = vmatpush1.msra.mxu0 0.0
    %197 = vmatprep.subr.mxu0 0.0
    %198 = vmatpush1.msra.mxu0 0.0
    %199 = vmatprep.subr.mxu0 0.0
    %200 = vmatpush1.msra.mxu0 0.0
    %201 = vmatprep.mubr.f32.mxu0 0.0
    %202 = vmatmul.mubr.f32.gmra.mrb[0].mxu0 %v126
    %v203 = vpop.f32.mrb[0].mxu0
    %v204 = vadd.f32 0.0, %v203
    %v205 = vpop.f32.mrb[0].mxu0
    %206 = vmatprep.mubr.f32.mxu0 0.0
    %207 = vmatmul.mubr.f32.gmra.mrb[0].mxu0 %v129
    %v208 = vpop.f32.mrb[0].mxu0
    %v209 = vadd.f32 0.0, %v208
    %v210 = vpop.f32.mrb[0].mxu0
    %211 = vmatprep.mubr.f32.mxu0 0.0
    %212 = vmatmul.mubr.f32.gmra.mrb[0].mxu0 %v132
    %v213 = vpop.f32.mrb[0].mxu0
    %v214 = vadd.f32 0.0, %v213
    %v215 = vpop.f32.mrb[0].mxu0
    %216 = vmatprep.mubr.f32.mxu0 0.0
    %217 = vmatmul.mubr.f32.gmra.mrb[0].mxu0 %v135
    %v218 = vpop.f32.mrb[0].mxu0
    %v219 = vadd.f32 0.0, %v218
    %v220 = vpop.f32.mrb[0].mxu0
    %221 = vdwg.mxu0
    %v223 = vsel %vm124, %v204, 0
    %v226 = vsel %vm124, %v209, 0
    %v229 = vsel %vm124, %v214, 0
    %v232 = vsel %vm124, %v219, 0
    %234 = vmatprep.subr.mxu0 0.0
    %235 = vmatpush1.msra.mxu0 %v56
    %236 = vmatprep.subr.mxu0 0.0
    %237 = vmatpush1.msra.mxu0 %v57
    %238 = vmatprep.subr.mxu0 0.0
    %239 = vmatpush1.msra.mxu0 %v58
    %240 = vmatprep.subr.mxu0 0.0
    %241 = vmatpush1.msra.mxu0 %v59
    %242 = vmatprep.subr.mxu0 0.0
    %243 = vmatpush1.msra.mxu0 0.0
    %244 = vmatprep.subr.mxu0 0.0
    %245 = vmatpush1.msra.mxu0 0.0
    %246 = vmatprep.subr.mxu0 0.0
    %247 = vmatpush1.msra.mxu0 0.0
    %248 = vmatprep.subr.mxu0 0.0
    %249 = vmatpush1.msra.mxu0 0.0
    %250 = vmatprep.subr.mxu0 0.0
    %251 = vmatpush1.msra.mxu0 0.0
    %252 = vmatprep.subr.mxu0 0.0
    %253 = vmatpush1.msra.mxu0 0.0
    %254 = vmatprep.subr.mxu0 0.0
    %255 = vmatpush1.msra.mxu0 0.0
    %256 = vmatprep.subr.mxu0 0.0
    %257 = vmatpush1.msra.mxu0 0.0
    %258 = vmatprep.subr.mxu0 0.0
    %259 = vmatpush1.msra.mxu0 0.0
    %260 = vmatprep.subr.mxu0 0.0
    %261 = vmatpush1.msra.mxu0 0.0
    %262 = vmatprep.subr.mxu0 0.0
    %263 = vmatpush1.msra.mxu0 0.0
    %264 = vmatprep.subr.mxu0 0.0
    %265 = vmatpush1.msra.mxu0 0.0
    %266 = vmatprep.subr.mxu0 0.0
    %267 = vmatpush1.msra.mxu0 0.0
    %268 = vmatprep.subr.mxu0 0.0
    %269 = vmatpush1.msra.mxu0 0.0
    %270 = vmatprep.subr.mxu0 0.0
    %271 = vmatpush1.msra.mxu0 0.0
    %272 = vmatprep.subr.mxu0 0.0
    %273 = vmatpush1.msra.mxu0 0.0
    %274 = vmatprep.subr.mxu0 0.0
    %275 = vmatpush1.msra.mxu0 0.0
    %276 = vmatprep.subr.mxu0 0.0
    %277 = vmatpush1.msra.mxu0 0.0
    %278 = vmatprep.subr.mxu0 0.0
    %279 = vmatpush1.msra.mxu0 0.0
    %280 = vmatprep.subr.mxu0 0.0
    %281 = vmatpush1.msra.mxu0 0.0
    %282 = vmatprep.subr.mxu0 0.0
    %283 = vmatpush1.msra.mxu0 0.0
    %284 = vmatprep.subr.mxu0 0.0
    %285 = vmatpush1.msra.mxu0 0.0
    %286 = vmatprep.subr.mxu0 0.0
    %287 = vmatpush1.msra.mxu0 0.0
    %288 = vmatprep.subr.mxu0 0.0
    %289 = vmatpush1.msra.mxu0 0.0
    %290 = vmatprep.subr.mxu0 0.0
    %291 = vmatpush1.msra.mxu0 0.0
    %292 = vmatprep.subr.mxu0 0.0
    %293 = vmatpush1.msra.mxu0 0.0
    %294 = vmatprep.subr.mxu0 0.0
    %295 = vmatpush1.msra.mxu0 0.0
    %296 = vmatprep.subr.mxu0 0.0
    %297 = vmatpush1.msra.mxu0 0.0
    %298 = vmatprep.mubr.f32.mxu0 0.0
    %299 = vmatmul.mubr.f32.gmra.mrb[0].mxu0 %v223
    %v300 = vpop.f32.mrb[0].mxu0
    %v301 = vadd.f32 0.0, %v300
    %v302 = vpop.f32.mrb[0].mxu0
    %303 = vmatprep.mubr.f32.mxu0 0.0
    %304 = vmatmul.mubr.f32.gmra.mrb[0].mxu0 %v226
    %v305 = vpop.f32.mrb[0].mxu0
    %v306 = vadd.f32 0.0, %v305
    %v307 = vpop.f32.mrb[0].mxu0
    %308 = vmatprep.mubr.f32.mxu0 0.0
    %309 = vmatmul.mubr.f32.gmra.mrb[0].mxu0 %v229
    %v310 = vpop.f32.mrb[0].mxu0
    %v311 = vadd.f32 0.0, %v310
    %v312 = vpop.f32.mrb[0].mxu0
    %313 = vmatprep.mubr.f32.mxu0 0.0
    %314 = vmatmul.mubr.f32.gmra.mrb[0].mxu0 %v232
    %v315 = vpop.f32.mrb[0].mxu0
    %v316 = vadd.f32 0.0, %v315
    %v317 = vpop.f32.mrb[0].mxu0
    %318 = vdwg.mxu0
    %319 = vmatprep.subr.mxu0 0.0
    %320 = vmatpush1.msra.mxu0 %v90
    %321 = vmatprep.subr.mxu0 0.0
    %322 = vmatpush1.msra.mxu0 %v91
    %323 = vmatprep.subr.mxu0 0.0
    %324 = vmatpush1.msra.mxu0 %v92
    %325 = vmatprep.subr.mxu0 0.0
    %326 = vmatpush1.msra.mxu0 %v93
    %327 = vmatprep.subr.mxu0 0.0
    %328 = vmatpush1.msra.mxu0 0.0
    %329 = vmatprep.subr.mxu0 0.0
    %330 = vmatpush1.msra.mxu0 0.0
    %331 = vmatprep.subr.mxu0 0.0
    %332 = vmatpush1.msra.mxu0 0.0
    %333 = vmatprep.subr.mxu0 0.0
    %334 = vmatpush1.msra.mxu0 0.0
    %335 = vmatprep.subr.mxu0 0.0
    %336 = vmatpush1.msra.mxu0 0.0
    %337 = vmatprep.subr.mxu0 0.0
    %338 = vmatpush1.msra.mxu0 0.0
    %339 = vmatprep.subr.mxu0 0.0
    %340 = vmatpush1.msra.mxu0 0.0
    %341 = vmatprep.subr.mxu0 0.0
    %342 = vmatpush1.msra.mxu0 0.0
    %343 = vmatprep.subr.mxu0 0.0
    %344 = vmatpush1.msra.mxu0 0.0
    %345 = vmatprep.subr.mxu0 0.0
    %346 = vmatpush1.msra.mxu0 0.0
    %347 = vmatprep.subr.mxu0 0.0
    %348 = vmatpush1.msra.mxu0 0.0
    %349 = vmatprep.subr.mxu0 0.0
    %350 = vmatpush1.msra.mxu0 0.0
    %351 = vmatprep.subr.mxu0 0.0
    %352 = vmatpush1.msra.mxu0 0.0
    %353 = vmatprep.subr.mxu0 0.0
    %354 = vmatpush1.msra.mxu0 0.0
    %355 = vmatprep.subr.mxu0 0.0
    %356 = vmatpush1.msra.mxu0 0.0
    %357 = vmatprep.subr.mxu0 0.0
    %358 = vmatpush1.msra.mxu0 0.0
    %359 = vmatprep.subr.mxu0 0.0
    %360 = vmatpush1.msra.mxu0 0.0
    %361 = vmatprep.subr.mxu0 0.0
    %362 = vmatpush1.msra.mxu0 0.0
    %363 = vmatprep.subr.mxu0 0.0
    %364 = vmatpush1.msra.mxu0 0.0
    %365 = vmatprep.subr.mxu0 0.0
    %366 = vmatpush1.msra.mxu0 0.0
    %367 = vmatprep.subr.mxu0 0.0
    %368 = vmatpush1.msra.mxu0 0.0
    %369 = vmatprep.subr.mxu0 0.0
    %370 = vmatpush1.msra.mxu0 0.0
    %371 = vmatprep.subr.mxu0 0.0
    %372 = vmatpush1.msra.mxu0 0.0
    %373 = vmatprep.subr.mxu0 0.0
    %374 = vmatpush1.msra.mxu0 0.0
    %375 = vmatprep.subr.mxu0 0.0
    %376 = vmatpush1.msra.mxu0 0.0
    %377 = vmatprep.subr.mxu0 0.0
    %378 = vmatpush1.msra.mxu0 0.0
    %379 = vmatprep.subr.mxu0 0.0
    %380 = vmatpush1.msra.mxu0 0.0
    %381 = vmatprep.subr.mxu0 0.0
    %382 = vmatpush1.msra.mxu0 0.0
    %383 = vmatprep.mubr.f32.mxu0 0.0
    %384 = vmatmul.mubr.f32.gmra.mrb[0].mxu0 %v126
    %v385 = vpop.f32.mrb[0].mxu0
    %v386 = vadd.f32 0.0, %v385
    %v387 = vpop.f32.mrb[0].mxu0
    %388 = vmatprep.mubr.f32.mxu0 0.0
    %389 = vmatmul.mubr.f32.gmra.mrb[0].mxu0 %v129
    %v390 = vpop.f32.mrb[0].mxu0
    %v391 = vadd.f32 0.0, %v390
    %v392 = vpop.f32.mrb[0].mxu0
    %393 = vmatprep.mubr.f32.mxu0 0.0
    %394 = vmatmul.mubr.f32.gmra.mrb[0].mxu0 %v132
    %v395 = vpop.f32.mrb[0].mxu0
    %v396 = vadd.f32 0.0, %v395
    %v397 = vpop.f32.mrb[0].mxu0
    %398 = vmatprep.mubr.f32.mxu0 0.0
    %399 = vmatmul.mubr.f32.gmra.mrb[0].mxu0 %v135
    %v400 = vpop.f32.mrb[0].mxu0
    %v401 = vadd.f32 0.0, %v400
    %v402 = vpop.f32.mrb[0].mxu0
    %403 = vdwg.mxu0
    %v405 = vsel %vm124, %v386, 0
    %v408 = vsel %vm124, %v391, 0
    %v411 = vsel %vm124, %v396, 0
    %v414 = vsel %vm124, %v401, 0
    %416 = vmatprep.subr.mxu0 0.0
    %417 = vmatpush1.msra.mxu0 %v56
    %418 = vmatprep.subr.mxu0 0.0
    %419 = vmatpush1.msra.mxu0 %v57
    %420 = vmatprep.subr.mxu0 0.0
    %421 = vmatpush1.msra.mxu0 %v58
    %422 = vmatprep.subr.mxu0 0.0
    %423 = vmatpush1.msra.mxu0 %v59
    %424 = vmatprep.subr.mxu0 0.0
    %425 = vmatpush1.msra.mxu0 0.0
    %426 = vmatprep.subr.mxu0 0.0
    %427 = vmatpush1.msra.mxu0 0.0
    %428 = vmatprep.subr.mxu0 0.0
    %429 = vmatpush1.msra.mxu0 0.0
    %430 = vmatprep.subr.mxu0 0.0
    %431 = vmatpush1.msra.mxu0 0.0
    %432 = vmatprep.subr.mxu0 0.0
    %433 = vmatpush1.msra.mxu0 0.0
    %434 = vmatprep.subr.mxu0 0.0
    %435 = vmatpush1.msra.mxu0 0.0
    %436 = vmatprep.subr.mxu0 0.0
    %437 = vmatpush1.msra.mxu0 0.0
    %438 = vmatprep.subr.mxu0 0.0
    %439 = vmatpush1.msra.mxu0 0.0
    %440 = vmatprep.subr.mxu0 0.0
    %441 = vmatpush1.msra.mxu0 0.0
    %442 = vmatprep.subr.mxu0 0.0
    %443 = vmatpush1.msra.mxu0 0.0
    %444 = vmatprep.subr.mxu0 0.0
    %445 = vmatpush1.msra.mxu0 0.0
    %446 = vmatprep.subr.mxu0 0.0
    %447 = vmatpush1.msra.mxu0 0.0
    %448 = vmatprep.subr.mxu0 0.0
    %449 = vmatpush1.msra.mxu0 0.0
    %450 = vmatprep.subr.mxu0 0.0
    %451 = vmatpush1.msra.mxu0 0.0
    %452 = vmatprep.subr.mxu0 0.0
    %453 = vmatpush1.msra.mxu0 0.0
    %454 = vmatprep.subr.mxu0 0.0
    %455 = vmatpush1.msra.mxu0 0.0
    %456 = vmatprep.subr.mxu0 0.0
    %457 = vmatpush1.msra.mxu0 0.0
    %458 = vmatprep.subr.mxu0 0.0
    %459 = vmatpush1.msra.mxu0 0.0
    %460 = vmatprep.subr.mxu0 0.0
    %461 = vmatpush1.msra.mxu0 0.0
    %462 = vmatprep.subr.mxu0 0.0
    %463 = vmatpush1.msra.mxu0 0.0
    %464 = vmatprep.subr.mxu0 0.0
    %465 = vmatpush1.msra.mxu0 0.0
    %466 = vmatprep.subr.mxu0 0.0
    %467 = vmatpush1.msra.mxu0 0.0
    %468 = vmatprep.subr.mxu0 0.0
    %469 = vmatpush1.msra.mxu0 0.0
    %470 = vmatprep.subr.mxu0 0.0
    %471 = vmatpush1.msra.mxu0 0.0
    %472 = vmatprep.subr.mxu0 0.0
    %473 = vmatpush1.msra.mxu0 0.0
    %474 = vmatprep.subr.mxu0 0.0
    %475 = vmatpush1.msra.mxu0 0.0
    %476 = vmatprep.subr.mxu0 0.0
    %477 = vmatpush1.msra.mxu0 0.0
    %478 = vmatprep.subr.mxu0 0.0
    %479 = vmatpush1.msra.mxu0 0.0
    %480 = vmatprep.mubr.f32.mxu0 0.0
    %481 = vmatmul.mubr.f32.gmra.mrb[0].mxu0 %v405
    %v482 = vpop.f32.mrb[0].mxu0
    %v483 = vadd.f32 1e-12, %v482
    %v484 = vpop.f32.mrb[0].mxu0
    %485 = vmatprep.mubr.f32.mxu0 0.0
    %486 = vmatmul.mubr.f32.gmra.mrb[0].mxu0 %v408
    %v487 = vpop.f32.mrb[0].mxu0
    %v488 = vadd.f32 1e-12, %v487
    %v489 = vpop.f32.mrb[0].mxu0
    %490 = vmatprep.mubr.f32.mxu0 0.0
    %491 = vmatmul.mubr.f32.gmra.mrb[0].mxu0 %v411
    %v492 = vpop.f32.mrb[0].mxu0
    %v493 = vadd.f32 1e-12, %v492
    %v494 = vpop.f32.mrb[0].mxu0
    %495 = vmatprep.mubr.f32.mxu0 0.0
    %496 = vmatmul.mubr.f32.gmra.mrb[0].mxu0 %v414
    %v497 = vpop.f32.mrb[0].mxu0
    %v498 = vadd.f32 1e-12, %v497
    %v499 = vpop.f32.mrb[0].mxu0
    %500 = vdwg.mxu0
    %v501 = vrcp.pop %v483
    %v502 = vrcp.pop %v488
    %v503 = vrcp.pop %v493
    %v504 = vrcp.pop %v498
    %v505 = vmul.f32 %v301, %v501
    %v506 = vmul.f32 %v306, %v502
    %v507 = vmul.f32 %v311, %v503
    %v508 = vmul.f32 %v316, %v504
    %v510 = vsel %vm124, %v505, 0
    %v513 = vsel %vm124, %v506, 0
    %v516 = vsel %vm124, %v507, 0
    %v519 = vsel %vm124, %v508, 0
    %521 = vmatprep.subr.mxu0 0.0
    %522 = vmatpush1.msra.mxu0 %v71
    %523 = vmatprep.subr.mxu0 0.0
    %524 = vmatpush1.msra.mxu0 %v72
    %525 = vmatprep.subr.mxu0 0.0
    %526 = vmatpush1.msra.mxu0 %v73
    %527 = vmatprep.subr.mxu0 0.0
    %528 = vmatpush1.msra.mxu0 %v74
    %529 = vmatprep.subr.mxu0 0.0
    %530 = vmatpush1.msra.mxu0 0.0
    %531 = vmatprep.subr.mxu0 0.0
    %532 = vmatpush1.msra.mxu0 0.0
    %533 = vmatprep.subr.mxu0 0.0
    %534 = vmatpush1.msra.mxu0 0.0
    %535 = vmatprep.subr.mxu0 0.0
    %536 = vmatpush1.msra.mxu0 0.0
    %537 = vmatprep.subr.mxu0 0.0
    %538 = vmatpush1.msra.mxu0 0.0
    %539 = vmatprep.subr.mxu0 0.0
    %540 = vmatpush1.msra.mxu0 0.0
    %541 = vmatprep.subr.mxu0 0.0
    %542 = vmatpush1.msra.mxu0 0.0
    %543 = vmatprep.subr.mxu0 0.0
    %544 = vmatpush1.msra.mxu0 0.0
    %545 = vmatprep.subr.mxu0 0.0
    %546 = vmatpush1.msra.mxu0 0.0
    %547 = vmatprep.subr.mxu0 0.0
    %548 = vmatpush1.msra.mxu0 0.0
    %549 = vmatprep.subr.mxu0 0.0
    %550 = vmatpush1.msra.mxu0 0.0
    %551 = vmatprep.subr.mxu0 0.0
    %552 = vmatpush1.msra.mxu0 0.0
    %553 = vmatprep.subr.mxu0 0.0
    %554 = vmatpush1.msra.mxu0 0.0
    %555 = vmatprep.subr.mxu0 0.0
    %556 = vmatpush1.msra.mxu0 0.0
    %557 = vmatprep.subr.mxu0 0.0
    %558 = vmatpush1.msra.mxu0 0.0
    %559 = vmatprep.subr.mxu0 0.0
    %560 = vmatpush1.msra.mxu0 0.0
    %561 = vmatprep.subr.mxu0 0.0
    %562 = vmatpush1.msra.mxu0 0.0
    %563 = vmatprep.subr.mxu0 0.0
    %564 = vmatpush1.msra.mxu0 0.0
    %565 = vmatprep.subr.mxu0 0.0
    %566 = vmatpush1.msra.mxu0 0.0
    %567 = vmatprep.subr.mxu0 0.0
    %568 = vmatpush1.msra.mxu0 0.0
    %569 = vmatprep.subr.mxu0 0.0
    %570 = vmatpush1.msra.mxu0 0.0
    %571 = vmatprep.subr.mxu0 0.0
    %572 = vmatpush1.msra.mxu0 0.0
    %573 = vmatprep.subr.mxu0 0.0
    %574 = vmatpush1.msra.mxu0 0.0
    %575 = vmatprep.subr.mxu0 0.0
    %576 = vmatpush1.msra.mxu0 0.0
    %577 = vmatprep.subr.mxu0 0.0
    %578 = vmatpush1.msra.mxu0 0.0
    %579 = vmatprep.subr.mxu0 0.0
    %580 = vmatpush1.msra.mxu0 0.0
    %581 = vmatprep.subr.mxu0 0.0
    %582 = vmatpush1.msra.mxu0 0.0
    %583 = vmatprep.subr.mxu0 0.0
    %584 = vmatpush1.msra.mxu0 0.0
    %585 = vmatprep.mubr.f32.mxu0 0.0
    %586 = vmatmul.mubr.f32.gmra.mrb[0].mxu0 %v510
    %v587 = vpop.f32.mrb[0].mxu0
    %v588 = vadd.f32 0.0, %v587
    %v589 = vpop.f32.mrb[0].mxu0
    %590 = vmatprep.mubr.f32.mxu0 0.0
    %591 = vmatmul.mubr.f32.gmra.mrb[0].mxu0 %v513
    %v592 = vpop.f32.mrb[0].mxu0
    %v593 = vadd.f32 0.0, %v592
    %v594 = vpop.f32.mrb[0].mxu0
    %595 = vmatprep.mubr.f32.mxu0 0.0
    %596 = vmatmul.mubr.f32.gmra.mrb[0].mxu0 %v516
    %v597 = vpop.f32.mrb[0].mxu0
    %v598 = vadd.f32 0.0, %v597
    %v599 = vpop.f32.mrb[0].mxu0
    %600 = vmatprep.mubr.f32.mxu0 0.0
    %601 = vmatmul.mubr.f32.gmra.mrb[0].mxu0 %v519
    %v602 = vpop.f32.mrb[0].mxu0
    %v603 = vadd.f32 0.0, %v602
    %v604 = vpop.f32.mrb[0].mxu0
    %605 = vdwg.mxu0
    %v607 = vsel %vm124, %v61, 0
    %v610 = vsel %vm124, %v62, 0
    %v613 = vsel %vm124, %v63, 0
    %v616 = vsel %vm124, %v64, 0
    %618 = vmatprep.subr.mxu0 0.0
    %619 = vmatpush1.msra.mxu0 %v588
    %620 = vmatprep.subr.mxu0 0.0
    %621 = vmatpush1.msra.mxu0 %v593
    %622 = vmatprep.subr.mxu0 0.0
    %623 = vmatpush1.msra.mxu0 %v598
    %624 = vmatprep.subr.mxu0 0.0
    %625 = vmatpush1.msra.mxu0 %v603
    %626 = vmatprep.subr.mxu0 0.0
    %627 = vmatpush1.msra.mxu0 0.0
    %628 = vmatprep.subr.mxu0 0.0
    %629 = vmatpush1.msra.mxu0 0.0
    %630 = vmatprep.subr.mxu0 0.0
    %631 = vmatpush1.msra.mxu0 0.0
    %632 = vmatprep.subr.mxu0 0.0
    %633 = vmatpush1.msra.mxu0 0.0
    %634 = vmatprep.subr.mxu0 0.0
    %635 = vmatpush1.msra.mxu0 0.0
    %636 = vmatprep.subr.mxu0 0.0
    %637 = vmatpush1.msra.mxu0 0.0
    %638 = vmatprep.subr.mxu0 0.0
    %639 = vmatpush1.msra.mxu0 0.0
    %640 = vmatprep.subr.mxu0 0.0
    %641 = vmatpush1.msra.mxu0 0.0
    %642 = vmatprep.subr.mxu0 0.0
    %643 = vmatpush1.msra.mxu0 0.0
    %644 = vmatprep.subr.mxu0 0.0
    %645 = vmatpush1.msra.mxu0 0.0
    %646 = vmatprep.subr.mxu0 0.0
    %647 = vmatpush1.msra.mxu0 0.0
    %648 = vmatprep.subr.mxu0 0.0
    %649 = vmatpush1.msra.mxu0 0.0
    %650 = vmatprep.subr.mxu0 0.0
    %651 = vmatpush1.msra.mxu0 0.0
    %652 = vmatprep.subr.mxu0 0.0
    %653 = vmatpush1.msra.mxu0 0.0
    %654 = vmatprep.subr.mxu0 0.0
    %655 = vmatpush1.msra.mxu0 0.0
    %656 = vmatprep.subr.mxu0 0.0
    %657 = vmatpush1.msra.mxu0 0.0
    %658 = vmatprep.subr.mxu0 0.0
    %659 = vmatpush1.msra.mxu0 0.0
    %660 = vmatprep.subr.mxu0 0.0
    %661 = vmatpush1.msra.mxu0 0.0
    %662 = vmatprep.subr.mxu0 0.0
    %663 = vmatpush1.msra.mxu0 0.0
    %664 = vmatprep.subr.mxu0 0.0
    %665 = vmatpush1.msra.mxu0 0.0
    %666 = vmatprep.subr.mxu0 0.0
    %667 = vmatpush1.msra.mxu0 0.0
    %668 = vmatprep.subr.mxu0 0.0
    %669 = vmatpush1.msra.mxu0 0.0
    %670 = vmatprep.subr.mxu0 0.0
    %671 = vmatpush1.msra.mxu0 0.0
    %672 = vmatprep.subr.mxu0 0.0
    %673 = vmatpush1.msra.mxu0 0.0
    %674 = vmatprep.subr.mxu0 0.0
    %675 = vmatpush1.msra.mxu0 0.0
    %676 = vmatprep.subr.mxu0 0.0
    %677 = vmatpush1.msra.mxu0 0.0
    %678 = vmatprep.subr.mxu0 0.0
    %679 = vmatpush1.msra.mxu0 0.0
    %680 = vmatprep.subr.mxu0 0.0
    %681 = vmatpush1.msra.mxu0 0.0
    %682 = vmatprep.mubr.f32.mxu0 0.0
    %683 = vmatmul.mubr.f32.gmra.mrb[0].mxu0 %v607
    %v684 = vpop.f32.mrb[0].mxu0
    %v685 = vadd.f32 0.0, %v684
    %v686 = vpop.f32.mrb[0].mxu0
    %687 = vmatprep.mubr.f32.mxu0 0.0
    %688 = vmatmul.mubr.f32.gmra.mrb[0].mxu0 %v610
    %v689 = vpop.f32.mrb[0].mxu0
    %v690 = vadd.f32 0.0, %v689
    %v691 = vpop.f32.mrb[0].mxu0
    %692 = vmatprep.mubr.f32.mxu0 0.0
    %693 = vmatmul.mubr.f32.gmra.mrb[0].mxu0 %v613
    %v694 = vpop.f32.mrb[0].mxu0
    %v695 = vadd.f32 0.0, %v694
    %v696 = vpop.f32.mrb[0].mxu0
    %697 = vmatprep.mubr.f32.mxu0 0.0
    %698 = vmatmul.mubr.f32.gmra.mrb[0].mxu0 %v616
    %v699 = vpop.f32.mrb[0].mxu0
    %v700 = vadd.f32 0.0, %v699
    %v701 = vpop.f32.mrb[0].mxu0
    %702 = vdwg.mxu0
    %v704 = vsel %vm124, %v66, 0
    %v707 = vsel %vm124, %v67, 0
    %v710 = vsel %vm124, %v68, 0
    %v713 = vsel %vm124, %v69, 0
    %715 = vmatprep.subr.mxu0 0.0
    %716 = vmatpush1.msra.mxu0 %v505
    %717 = vmatprep.subr.mxu0 0.0
    %718 = vmatpush1.msra.mxu0 %v506
    %719 = vmatprep.subr.mxu0 0.0
    %720 = vmatpush1.msra.mxu0 %v507
    %721 = vmatprep.subr.mxu0 0.0
    %722 = vmatpush1.msra.mxu0 %v508
    %723 = vmatprep.subr.mxu0 0.0
    %724 = vmatpush1.msra.mxu0 0.0
    %725 = vmatprep.subr.mxu0 0.0
    %726 = vmatpush1.msra.mxu0 0.0
    %727 = vmatprep.subr.mxu0 0.0
    %728 = vmatpush1.msra.mxu0 0.0
    %729 = vmatprep.subr.mxu0 0.0
    %730 = vmatpush1.msra.mxu0 0.0
    %731 = vmatprep.subr.mxu0 0.0
    %732 = vmatpush1.msra.mxu0 0.0
    %733 = vmatprep.subr.mxu0 0.0
    %734 = vmatpush1.msra.mxu0 0.0
    %735 = vmatprep.subr.mxu0 0.0
    %736 = vmatpush1.msra.mxu0 0.0
    %737 = vmatprep.subr.mxu0 0.0
    %738 = vmatpush1.msra.mxu0 0.0
    %739 = vmatprep.subr.mxu0 0.0
    %740 = vmatpush1.msra.mxu0 0.0
    %741 = vmatprep.subr.mxu0 0.0
    %742 = vmatpush1.msra.mxu0 0.0
    %743 = vmatprep.subr.mxu0 0.0
    %744 = vmatpush1.msra.mxu0 0.0
    %745 = vmatprep.subr.mxu0 0.0
    %746 = vmatpush1.msra.mxu0 0.0
    %747 = vmatprep.subr.mxu0 0.0
    %748 = vmatpush1.msra.mxu0 0.0
    %749 = vmatprep.subr.mxu0 0.0
    %750 = vmatpush1.msra.mxu0 0.0
    %751 = vmatprep.subr.mxu0 0.0
    %752 = vmatpush1.msra.mxu0 0.0
    %753 = vmatprep.subr.mxu0 0.0
    %754 = vmatpush1.msra.mxu0 0.0
    %755 = vmatprep.subr.mxu0 0.0
    %756 = vmatpush1.msra.mxu0 0.0
    %757 = vmatprep.subr.mxu0 0.0
    %758 = vmatpush1.msra.mxu0 0.0
    %759 = vmatprep.subr.mxu0 0.0
    %760 = vmatpush1.msra.mxu0 0.0
    %761 = vmatprep.subr.mxu0 0.0
    %762 = vmatpush1.msra.mxu0 0.0
    %763 = vmatprep.subr.mxu0 0.0
    %764 = vmatpush1.msra.mxu0 0.0
    %765 = vmatprep.subr.mxu0 0.0
    %766 = vmatpush1.msra.mxu0 0.0
    %767 = vmatprep.subr.mxu0 0.0
    %768 = vmatpush1.msra.mxu0 0.0
    %769 = vmatprep.subr.mxu0 0.0
    %770 = vmatpush1.msra.mxu0 0.0
    %771 = vmatprep.subr.mxu0 0.0
    %772 = vmatpush1.msra.mxu0 0.0
    %773 = vmatprep.subr.mxu0 0.0
    %774 = vmatpush1.msra.mxu0 0.0
    %775 = vmatprep.subr.mxu0 0.0
    %776 = vmatpush1.msra.mxu0 0.0
    %777 = vmatprep.subr.mxu0 0.0
    %778 = vmatpush1.msra.mxu0 0.0
    %779 = vmatprep.mubr.f32.mxu0 0.0
    %780 = vmatmul.mubr.f32.gmra.mrb[0].mxu0 %v704
    %v781 = vpop.f32.mrb[0].mxu0
    %v782 = vadd.f32 0.0, %v781
    %v783 = vpop.f32.mrb[0].mxu0
    %784 = vmatprep.mubr.f32.mxu0 0.0
    %785 = vmatmul.mubr.f32.gmra.mrb[0].mxu0 %v707
    %v786 = vpop.f32.mrb[0].mxu0
    %v787 = vadd.f32 0.0, %v786
    %v788 = vpop.f32.mrb[0].mxu0
    %789 = vmatprep.mubr.f32.mxu0 0.0
    %790 = vmatmul.mubr.f32.gmra.mrb[0].mxu0 %v710
    %v791 = vpop.f32.mrb[0].mxu0
    %v792 = vadd.f32 0.0, %v791
    %v793 = vpop.f32.mrb[0].mxu0
    %794 = vmatprep.mubr.f32.mxu0 0.0
    %795 = vmatmul.mubr.f32.gmra.mrb[0].mxu0 %v713
    %v796 = vpop.f32.mrb[0].mxu0
    %v797 = vadd.f32 0.0, %v796
    %v798 = vpop.f32.mrb[0].mxu0
    %799 = vdwg.mxu0
    %v801 = vsel %vm124, %v782, 0
    %v804 = vsel %vm124, %v787, 0
    %v807 = vsel %vm124, %v792, 0
    %v810 = vsel %vm124, %v797, 0
    %812 = vmatprep.subr.mxu0 0.0
    %813 = vmatpush1.msra.mxu0 %v61
    %814 = vmatprep.subr.mxu0 0.0
    %815 = vmatpush1.msra.mxu0 %v62
    %816 = vmatprep.subr.mxu0 0.0
    %817 = vmatpush1.msra.mxu0 %v63
    %818 = vmatprep.subr.mxu0 0.0
    %819 = vmatpush1.msra.mxu0 %v64
    %820 = vmatprep.subr.mxu0 0.0
    %821 = vmatpush1.msra.mxu0 0.0
    %822 = vmatprep.subr.mxu0 0.0
    %823 = vmatpush1.msra.mxu0 0.0
    %824 = vmatprep.subr.mxu0 0.0
    %825 = vmatpush1.msra.mxu0 0.0
    %826 = vmatprep.subr.mxu0 0.0
    %827 = vmatpush1.msra.mxu0 0.0
    %828 = vmatprep.subr.mxu0 0.0
    %829 = vmatpush1.msra.mxu0 0.0
    %830 = vmatprep.subr.mxu0 0.0
    %831 = vmatpush1.msra.mxu0 0.0
    %832 = vmatprep.subr.mxu0 0.0
    %833 = vmatpush1.msra.mxu0 0.0
    %834 = vmatprep.subr.mxu0 0.0
    %835 = vmatpush1.msra.mxu0 0.0
    %836 = vmatprep.subr.mxu0 0.0
    %837 = vmatpush1.msra.mxu0 0.0
    %838 = vmatprep.subr.mxu0 0.0
    %839 = vmatpush1.msra.mxu0 0.0
    %840 = vmatprep.subr.mxu0 0.0
    %841 = vmatpush1.msra.mxu0 0.0
    %842 = vmatprep.subr.mxu0 0.0
    %843 = vmatpush1.msra.mxu0 0.0
    %844 = vmatprep.subr.mxu0 0.0
    %845 = vmatpush1.msra.mxu0 0.0
    %846 = vmatprep.subr.mxu0 0.0
    %847 = vmatpush1.msra.mxu0 0.0
    %848 = vmatprep.subr.mxu0 0.0
    %849 = vmatpush1.msra.mxu0 0.0
    %850 = vmatprep.subr.mxu0 0.0
    %851 = vmatpush1.msra.mxu0 0.0
    %852 = vmatprep.subr.mxu0 0.0
    %853 = vmatpush1.msra.mxu0 0.0
    %854 = vmatprep.subr.mxu0 0.0
    %855 = vmatpush1.msra.mxu0 0.0
    %856 = vmatprep.subr.mxu0 0.0
    %857 = vmatpush1.msra.mxu0 0.0
    %858 = vmatprep.subr.mxu0 0.0
    %859 = vmatpush1.msra.mxu0 0.0
    %860 = vmatprep.subr.mxu0 0.0
    %861 = vmatpush1.msra.mxu0 0.0
    %862 = vmatprep.subr.mxu0 0.0
    %863 = vmatpush1.msra.mxu0 0.0
    %864 = vmatprep.subr.mxu0 0.0
    %865 = vmatpush1.msra.mxu0 0.0
    %866 = vmatprep.subr.mxu0 0.0
    %867 = vmatpush1.msra.mxu0 0.0
    %868 = vmatprep.subr.mxu0 0.0
    %869 = vmatpush1.msra.mxu0 0.0
    %870 = vmatprep.subr.mxu0 0.0
    %871 = vmatpush1.msra.mxu0 0.0
    %872 = vmatprep.subr.mxu0 0.0
    %873 = vmatpush1.msra.mxu0 0.0
    %874 = vmatprep.subr.mxu0 0.0
    %875 = vmatpush1.msra.mxu0 0.0
    %876 = vmatprep.mubr.f32.mxu0 0.0
    %877 = vmatmul.mubr.f32.gmra.mrb[0].mxu0 %v801
    %v878 = vpop.f32.mrb[0].mxu0
    %v879 = vadd.f32 0.0, %v878
    %v880 = vpop.f32.mrb[0].mxu0
    %881 = vmatprep.mubr.f32.mxu0 0.0
    %882 = vmatmul.mubr.f32.gmra.mrb[0].mxu0 %v804
    %v883 = vpop.f32.mrb[0].mxu0
    %v884 = vadd.f32 0.0, %v883
    %v885 = vpop.f32.mrb[0].mxu0
    %886 = vmatprep.mubr.f32.mxu0 0.0
    %887 = vmatmul.mubr.f32.gmra.mrb[0].mxu0 %v807
    %v888 = vpop.f32.mrb[0].mxu0
    %v889 = vadd.f32 0.0, %v888
    %v890 = vpop.f32.mrb[0].mxu0
    %891 = vmatprep.mubr.f32.mxu0 0.0
    %892 = vmatmul.mubr.f32.gmra.mrb[0].mxu0 %v810
    %v893 = vpop.f32.mrb[0].mxu0
    %v894 = vadd.f32 0.0, %v893
    %v895 = vpop.f32.mrb[0].mxu0
    %896 = vdwg.mxu0
    %v897 = vand.u32 2147483647, %v879
    %v898 = vand.u32 2147483647, %v884
    %v899 = vand.u32 2147483647, %v889
    %v900 = vand.u32 2147483647, %v894
    %v901 = vand.u32 2147483647, %v685
    %v902 = vand.u32 2147483647, %v690
    %v903 = vand.u32 2147483647, %v695
    %v904 = vand.u32 2147483647, %v700
    %v905 = vmul.f32 %v879, %v879
    %v906 = vmul.f32 %v884, %v884
    %v907 = vmul.f32 %v889, %v889
    %v908 = vmul.f32 %v894, %v894
    %v909 = vmul.f32 %v685, %v685
    %v910 = vmul.f32 %v690, %v690
    %v911 = vmul.f32 %v695, %v695
    %v912 = vmul.f32 %v700, %v700
    %v913 = vadd.f32 %v905, %v909
    %v914 = vadd.f32 %v906, %v910
    %v915 = vadd.f32 %v907, %v911
    %v916 = vadd.f32 %v908, %v912
    %v917 = vadd.f32 %v913, 1e-09
    %v918 = vadd.f32 %v914, 1e-09
    %v919 = vadd.f32 %v915, 1e-09
    %v920 = vadd.f32 %v916, 1e-09
    %v921 = vrsqrt.pop %v917
    %v922 = vmul.f32 %v917, %v921
    %vm923 = vcmp.eq.f32.partialorder %v917, inf
    %v924 = vsel %vm923, %v917, %v922
    %vm925 = vcmp.eq.f32.partialorder %v917, 0.0
    %v926 = vand.u32 %v917, 2147483648
    %v927 = vsel %vm925, %v926, %v924
    %v928 = vrsqrt.pop %v918
    %v929 = vmul.f32 %v918, %v928
    %vm930 = vcmp.eq.f32.partialorder %v918, inf
    %v931 = vsel %vm930, %v918, %v929
    %vm932 = vcmp.eq.f32.partialorder %v918, 0.0
    %v933 = vand.u32 %v918, 2147483648
    %v934 = vsel %vm932, %v933, %v931
    %v935 = vrsqrt.pop %v919
    %v936 = vmul.f32 %v919, %v935
    %vm937 = vcmp.eq.f32.partialorder %v919, inf
    %v938 = vsel %vm937, %v919, %v936
    %vm939 = vcmp.eq.f32.partialorder %v919, 0.0
    %v940 = vand.u32 %v919, 2147483648
    %v941 = vsel %vm939, %v940, %v938
    %v942 = vrsqrt.pop %v920
    %v943 = vmul.f32 %v920, %v942
    %vm944 = vcmp.eq.f32.partialorder %v920, inf
    %v945 = vsel %vm944, %v920, %v943
    %vm946 = vcmp.eq.f32.partialorder %v920, 0.0
    %v947 = vand.u32 %v920, 2147483648
    %v948 = vsel %vm946, %v947, %v945
    %vm949 = vcmp.ne.f32.partialorder %v90, 0.0
    %vm950 = vcmp.ne.f32.partialorder %v91, 0.0
    %vm951 = vcmp.ne.f32.partialorder %v92, 0.0
    %vm952 = vcmp.ne.f32.partialorder %v93, 0.0
    %v953 = vsel %vm949, 1, 0
    %v954 = vsel %vm950, 1, 0
    %v955 = vsel %vm951, 1, 0
    %v956 = vsel %vm952, 1, 0
    %v957 = vcvt.s32.f32 %v953
    %v958 = vcvt.s32.f32 %v954
    %v959 = vcvt.s32.f32 %v955
    %v960 = vcvt.s32.f32 %v956
    %v962 = vsel %vm124, %v86, 0
    %v965 = vsel %vm124, %v87, 0
    %v968 = vsel %vm124, %v88, 0
    %v971 = vsel %vm124, %v89, 0
    %973 = vmatprep.subr.mxu0 0.0
    %974 = vmatpush1.msra.mxu0 %v957
    %975 = vmatprep.subr.mxu0 0.0
    %976 = vmatpush1.msra.mxu0 %v958
    %977 = vmatprep.subr.mxu0 0.0
    %978 = vmatpush1.msra.mxu0 %v959
    %979 = vmatprep.subr.mxu0 0.0
    %980 = vmatpush1.msra.mxu0 %v960
    %981 = vmatprep.subr.mxu0 0.0
    %982 = vmatpush1.msra.mxu0 0.0
    %983 = vmatprep.subr.mxu0 0.0
    %984 = vmatpush1.msra.mxu0 0.0
    %985 = vmatprep.subr.mxu0 0.0
    %986 = vmatpush1.msra.mxu0 0.0
    %987 = vmatprep.subr.mxu0 0.0
    %988 = vmatpush1.msra.mxu0 0.0
    %989 = vmatprep.subr.mxu0 0.0
    %990 = vmatpush1.msra.mxu0 0.0
    %991 = vmatprep.subr.mxu0 0.0
    %992 = vmatpush1.msra.mxu0 0.0
    %993 = vmatprep.subr.mxu0 0.0
    %994 = vmatpush1.msra.mxu0 0.0
    %995 = vmatprep.subr.mxu0 0.0
    %996 = vmatpush1.msra.mxu0 0.0
    %997 = vmatprep.subr.mxu0 0.0
    %998 = vmatpush1.msra.mxu0 0.0
    %999 = vmatprep.subr.mxu0 0.0
    %1000 = vmatpush1.msra.mxu0 0.0
    %1001 = vmatprep.subr.mxu0 0.0
    %1002 = vmatpush1.msra.mxu0 0.0
    %1003 = vmatprep.subr.mxu0 0.0
    %1004 = vmatpush1.msra.mxu0 0.0
    %1005 = vmatprep.subr.mxu0 0.0
    %1006 = vmatpush1.msra.mxu0 0.0
    %1007 = vmatprep.subr.mxu0 0.0
    %1008 = vmatpush1.msra.mxu0 0.0
    %1009 = vmatprep.subr.mxu0 0.0
    %1010 = vmatpush1.msra.mxu0 0.0
    %1011 = vmatprep.subr.mxu0 0.0
    %1012 = vmatpush1.msra.mxu0 0.0
    %1013 = vmatprep.subr.mxu0 0.0
    %1014 = vmatpush1.msra.mxu0 0.0
    %1015 = vmatprep.subr.mxu0 0.0
    %1016 = vmatpush1.msra.mxu0 0.0
    %1017 = vmatprep.subr.mxu0 0.0
    %1018 = vmatpush1.msra.mxu0 0.0
    %1019 = vmatprep.subr.mxu0 0.0
    %1020 = vmatpush1.msra.mxu0 0.0
    %1021 = vmatprep.subr.mxu0 0.0
    %1022 = vmatpush1.msra.mxu0 0.0
    %1023 = vmatprep.subr.mxu0 0.0
    %1024 = vmatpush1.msra.mxu0 0.0
    %1025 = vmatprep.subr.mxu0 0.0
    %1026 = vmatpush1.msra.mxu0 0.0
    %1027 = vmatprep.subr.mxu0 0.0
    %1028 = vmatpush1.msra.mxu0 0.0
    %1029 = vmatprep.subr.mxu0 0.0
    %1030 = vmatpush1.msra.mxu0 0.0
    %1031 = vmatprep.subr.mxu0 0.0
    %1032 = vmatpush1.msra.mxu0 0.0
    %1033 = vmatprep.subr.mxu0 0.0
    %1034 = vmatpush1.msra.mxu0 0.0
    %1035 = vmatprep.subr.mxu0 0.0
    %1036 = vmatpush1.msra.mxu0 0.0
    %1037 = vmatprep.mubr.f32.mxu0 0.0
    %1038 = vmatmul.mubr.f32.gmra.mrb[0].mxu0 %v962
    %v1039 = vpop.f32.mrb[0].mxu0
    %v1040 = vadd.f32 0.0, %v1039
    %v1041 = vpop.f32.mrb[0].mxu0
    %1042 = vmatprep.mubr.f32.mxu0 0.0
    %1043 = vmatmul.mubr.f32.gmra.mrb[0].mxu0 %v965
    %v1044 = vpop.f32.mrb[0].mxu0
    %v1045 = vadd.f32 0.0, %v1044
    %v1046 = vpop.f32.mrb[0].mxu0
    %1047 = vmatprep.mubr.f32.mxu0 0.0
    %1048 = vmatmul.mubr.f32.gmra.mrb[0].mxu0 %v968
    %v1049 = vpop.f32.mrb[0].mxu0
    %v1050 = vadd.f32 0.0, %v1049
    %v1051 = vpop.f32.mrb[0].mxu0
    %1052 = vmatprep.mubr.f32.mxu0 0.0
    %1053 = vmatmul.mubr.f32.gmra.mrb[0].mxu0 %v971
    %v1054 = vpop.f32.mrb[0].mxu0
    %v1055 = vadd.f32 0.0, %v1054
    %v1056 = vpop.f32.mrb[0].mxu0
    %1057 = vdwg.mxu0
    %v1059 = vsel %vm124, %v1040, 0
    %v1062 = vsel %vm124, %v1045, 0
    %v1065 = vsel %vm124, %v1050, 0
    %v1068 = vsel %vm124, %v1055, 0
    %1070 = vmatprep.subr.mxu0 0.0
    %1071 = vmatpush1.msra.mxu0 %v86
    %1072 = vmatprep.subr.mxu0 0.0
    %1073 = vmatpush1.msra.mxu0 %v87
    %1074 = vmatprep.subr.mxu0 0.0
    %1075 = vmatpush1.msra.mxu0 %v88
    %1076 = vmatprep.subr.mxu0 0.0
    %1077 = vmatpush1.msra.mxu0 %v89
    %1078 = vmatprep.subr.mxu0 0.0
    %1079 = vmatpush1.msra.mxu0 0.0
    %1080 = vmatprep.subr.mxu0 0.0
    %1081 = vmatpush1.msra.mxu0 0.0
    %1082 = vmatprep.subr.mxu0 0.0
    %1083 = vmatpush1.msra.mxu0 0.0
    %1084 = vmatprep.subr.mxu0 0.0
    %1085 = vmatpush1.msra.mxu0 0.0
    %1086 = vmatprep.subr.mxu0 0.0
    %1087 = vmatpush1.msra.mxu0 0.0
    %1088 = vmatprep.subr.mxu0 0.0
    %1089 = vmatpush1.msra.mxu0 0.0
    %1090 = vmatprep.subr.mxu0 0.0
    %1091 = vmatpush1.msra.mxu0 0.0
    %1092 = vmatprep.subr.mxu0 0.0
    %1093 = vmatpush1.msra.mxu0 0.0
    %1094 = vmatprep.subr.mxu0 0.0
    %1095 = vmatpush1.msra.mxu0 0.0
    %1096 = vmatprep.subr.mxu0 0.0
    %1097 = vmatpush1.msra.mxu0 0.0
    %1098 = vmatprep.subr.mxu0 0.0
    %1099 = vmatpush1.msra.mxu0 0.0
    %1100 = vmatprep.subr.mxu0 0.0
    %1101 = vmatpush1.msra.mxu0 0.0
    %1102 = vmatprep.subr.mxu0 0.0
    %1103 = vmatpush1.msra.mxu0 0.0
    %1104 = vmatprep.subr.mxu0 0.0
    %1105 = vmatpush1.msra.mxu0 0.0
    %1106 = vmatprep.subr.mxu0 0.0
    %1107 = vmatpush1.msra.mxu0 0.0
    %1108 = vmatprep.subr.mxu0 0.0
    %1109 = vmatpush1.msra.mxu0 0.0
    %1110 = vmatprep.subr.mxu0 0.0
    %1111 = vmatpush1.msra.mxu0 0.0
    %1112 = vmatprep.subr.mxu0 0.0
    %1113 = vmatpush1.msra.mxu0 0.0
    %1114 = vmatprep.subr.mxu0 0.0
    %1115 = vmatpush1.msra.mxu0 0.0
    %1116 = vmatprep.subr.mxu0 0.0
    %1117 = vmatpush1.msra.mxu0 0.0
    %1118 = vmatprep.subr.mxu0 0.0
    %1119 = vmatpush1.msra.mxu0 0.0
    %1120 = vmatprep.subr.mxu0 0.0
    %1121 = vmatpush1.msra.mxu0 0.0
    %1122 = vmatprep.subr.mxu0 0.0
    %1123 = vmatpush1.msra.mxu0 0.0
    %1124 = vmatprep.subr.mxu0 0.0
    %1125 = vmatpush1.msra.mxu0 0.0
    %1126 = vmatprep.subr.mxu0 0.0
    %1127 = vmatpush1.msra.mxu0 0.0
    %1128 = vmatprep.subr.mxu0 0.0
    %1129 = vmatpush1.msra.mxu0 0.0
    %1130 = vmatprep.subr.mxu0 0.0
    %1131 = vmatpush1.msra.mxu0 0.0
    %1132 = vmatprep.subr.mxu0 0.0
    %1133 = vmatpush1.msra.mxu0 0.0
    %1134 = vmatprep.mubr.f32.mxu0 0.0
    %1135 = vmatmul.mubr.f32.gmra.mrb[0].mxu0 %v1059
    %v1136 = vpop.f32.mrb[0].mxu0
    %v1137 = vadd.f32 0.0, %v1136
    %v1138 = vpop.f32.mrb[0].mxu0
    %1139 = vmatprep.mubr.f32.mxu0 0.0
    %1140 = vmatmul.mubr.f32.gmra.mrb[0].mxu0 %v1062
    %v1141 = vpop.f32.mrb[0].mxu0
    %v1142 = vadd.f32 0.0, %v1141
    %v1143 = vpop.f32.mrb[0].mxu0
    %1144 = vmatprep.mubr.f32.mxu0 0.0
    %1145 = vmatmul.mubr.f32.gmra.mrb[0].mxu0 %v1065
    %v1146 = vpop.f32.mrb[0].mxu0
    %v1147 = vadd.f32 0.0, %v1146
    %v1148 = vpop.f32.mrb[0].mxu0
    %1149 = vmatprep.mubr.f32.mxu0 0.0
    %1150 = vmatmul.mubr.f32.gmra.mrb[0].mxu0 %v1068
    %v1151 = vpop.f32.mrb[0].mxu0
    %v1152 = vadd.f32 0.0, %v1151
    %v1153 = vpop.f32.mrb[0].mxu0
    %1154 = vdwg.mxu0
    %vm1155 = vcmp.gt.f32.partialorder %v1137, 8.5
    %vm1156 = vcmp.gt.f32.partialorder %v1142, 8.5
    %vm1157 = vcmp.gt.f32.partialorder %v1147, 8.5
    %vm1158 = vcmp.gt.f32.partialorder %v1152, 8.5
    %vm1159 = vcmp.gt.f32.partialorder %v913, 0.0
    %vm1160 = vcmp.gt.f32.partialorder %v914, 0.0
    %vm1161 = vcmp.gt.f32.partialorder %v915, 0.0
    %vm1162 = vcmp.gt.f32.partialorder %v916, 0.0
    %vm1163 = vmand %vm1155, %vm1159
    %vm1164 = vmand %vm1156, %vm1160
    %vm1165 = vmand %vm1157, %vm1161
    %vm1166 = vmand %vm1158, %vm1162
    %v1168 = vsel %vm124, %v76, 0
    %v1171 = vsel %vm124, %v77, 0
    %v1174 = vsel %vm124, %v78, 0
    %v1177 = vsel %vm124, %v79, 0
    %1179 = vmatprep.subr.mxu0 0.0
    %1180 = vmatpush1.msra.mxu0 %v927
    %1181 = vmatprep.subr.mxu0 0.0
    %1182 = vmatpush1.msra.mxu0 %v934
    %1183 = vmatprep.subr.mxu0 0.0
    %1184 = vmatpush1.msra.mxu0 %v941
    %1185 = vmatprep.subr.mxu0 0.0
    %1186 = vmatpush1.msra.mxu0 %v948
    %1187 = vmatprep.subr.mxu0 0.0
    %1188 = vmatpush1.msra.mxu0 0.0
    %1189 = vmatprep.subr.mxu0 0.0
    %1190 = vmatpush1.msra.mxu0 0.0
    %1191 = vmatprep.subr.mxu0 0.0
    %1192 = vmatpush1.msra.mxu0 0.0
    %1193 = vmatprep.subr.mxu0 0.0
    %1194 = vmatpush1.msra.mxu0 0.0
    %1195 = vmatprep.subr.mxu0 0.0
    %1196 = vmatpush1.msra.mxu0 0.0
    %1197 = vmatprep.subr.mxu0 0.0
    %1198 = vmatpush1.msra.mxu0 0.0
    %1199 = vmatprep.subr.mxu0 0.0
    %1200 = vmatpush1.msra.mxu0 0.0
    %1201 = vmatprep.subr.mxu0 0.0
    %1202 = vmatpush1.msra.mxu0 0.0
    %1203 = vmatprep.subr.mxu0 0.0
    %1204 = vmatpush1.msra.mxu0 0.0
    %1205 = vmatprep.subr.mxu0 0.0
    %1206 = vmatpush1.msra.mxu0 0.0
    %1207 = vmatprep.subr.mxu0 0.0
    %1208 = vmatpush1.msra.mxu0 0.0
    %1209 = vmatprep.subr.mxu0 0.0
    %1210 = vmatpush1.msra.mxu0 0.0
    %1211 = vmatprep.subr.mxu0 0.0
    %1212 = vmatpush1.msra.mxu0 0.0
    %1213 = vmatprep.subr.mxu0 0.0
    %1214 = vmatpush1.msra.mxu0 0.0
    %1215 = vmatprep.subr.mxu0 0.0
    %1216 = vmatpush1.msra.mxu0 0.0
    %1217 = vmatprep.subr.mxu0 0.0
    %1218 = vmatpush1.msra.mxu0 0.0
    %1219 = vmatprep.subr.mxu0 0.0
    %1220 = vmatpush1.msra.mxu0 0.0
    %1221 = vmatprep.subr.mxu0 0.0
    %1222 = vmatpush1.msra.mxu0 0.0
    %1223 = vmatprep.subr.mxu0 0.0
    %1224 = vmatpush1.msra.mxu0 0.0
    %1225 = vmatprep.subr.mxu0 0.0
    %1226 = vmatpush1.msra.mxu0 0.0
    %1227 = vmatprep.subr.mxu0 0.0
    %1228 = vmatpush1.msra.mxu0 0.0
    %1229 = vmatprep.subr.mxu0 0.0
    %1230 = vmatpush1.msra.mxu0 0.0
    %1231 = vmatprep.subr.mxu0 0.0
    %1232 = vmatpush1.msra.mxu0 0.0
    %1233 = vmatprep.subr.mxu0 0.0
    %1234 = vmatpush1.msra.mxu0 0.0
    %1235 = vmatprep.subr.mxu0 0.0
    %1236 = vmatpush1.msra.mxu0 0.0
    %1237 = vmatprep.subr.mxu0 0.0
    %1238 = vmatpush1.msra.mxu0 0.0
    %1239 = vmatprep.subr.mxu0 0.0
    %1240 = vmatpush1.msra.mxu0 0.0
    %1241 = vmatprep.subr.mxu0 0.0
    %1242 = vmatpush1.msra.mxu0 0.0
    %1243 = vmatprep.mubr.f32.mxu0 0.0
    %1244 = vmatmul.mubr.f32.gmra.mrb[0].mxu0 %v1168
    %v1245 = vpop.f32.mrb[0].mxu0
    %v1246 = vadd.f32 0.0, %v1245
    %v1247 = vpop.f32.mrb[0].mxu0
    %1248 = vmatprep.mubr.f32.mxu0 0.0
    %1249 = vmatmul.mubr.f32.gmra.mrb[0].mxu0 %v1171
    %v1250 = vpop.f32.mrb[0].mxu0
    %v1251 = vadd.f32 0.0, %v1250
    %v1252 = vpop.f32.mrb[0].mxu0
    %1253 = vmatprep.mubr.f32.mxu0 0.0
    %1254 = vmatmul.mubr.f32.gmra.mrb[0].mxu0 %v1174
    %v1255 = vpop.f32.mrb[0].mxu0
    %v1256 = vadd.f32 0.0, %v1255
    %v1257 = vpop.f32.mrb[0].mxu0
    %1258 = vmatprep.mubr.f32.mxu0 0.0
    %1259 = vmatmul.mubr.f32.gmra.mrb[0].mxu0 %v1177
    %v1260 = vpop.f32.mrb[0].mxu0
    %v1261 = vadd.f32 0.0, %v1260
    %v1262 = vpop.f32.mrb[0].mxu0
    %1263 = vdwg.mxu0
    %v1265 = vsel %vm124, %v81, 0
    %v1268 = vsel %vm124, %v82, 0
    %v1271 = vsel %vm124, %v83, 0
    %v1274 = vsel %vm124, %v84, 0
    %1276 = vmatprep.subr.mxu0 0.0
    %1277 = vmatpush1.msra.mxu0 %v927
    %1278 = vmatprep.subr.mxu0 0.0
    %1279 = vmatpush1.msra.mxu0 %v934
    %1280 = vmatprep.subr.mxu0 0.0
    %1281 = vmatpush1.msra.mxu0 %v941
    %1282 = vmatprep.subr.mxu0 0.0
    %1283 = vmatpush1.msra.mxu0 %v948
    %1284 = vmatprep.subr.mxu0 0.0
    %1285 = vmatpush1.msra.mxu0 0.0
    %1286 = vmatprep.subr.mxu0 0.0
    %1287 = vmatpush1.msra.mxu0 0.0
    %1288 = vmatprep.subr.mxu0 0.0
    %1289 = vmatpush1.msra.mxu0 0.0
    %1290 = vmatprep.subr.mxu0 0.0
    %1291 = vmatpush1.msra.mxu0 0.0
    %1292 = vmatprep.subr.mxu0 0.0
    %1293 = vmatpush1.msra.mxu0 0.0
    %1294 = vmatprep.subr.mxu0 0.0
    %1295 = vmatpush1.msra.mxu0 0.0
    %1296 = vmatprep.subr.mxu0 0.0
    %1297 = vmatpush1.msra.mxu0 0.0
    %1298 = vmatprep.subr.mxu0 0.0
    %1299 = vmatpush1.msra.mxu0 0.0
    %1300 = vmatprep.subr.mxu0 0.0
    %1301 = vmatpush1.msra.mxu0 0.0
    %1302 = vmatprep.subr.mxu0 0.0
    %1303 = vmatpush1.msra.mxu0 0.0
    %1304 = vmatprep.subr.mxu0 0.0
    %1305 = vmatpush1.msra.mxu0 0.0
    %1306 = vmatprep.subr.mxu0 0.0
    %1307 = vmatpush1.msra.mxu0 0.0
    %1308 = vmatprep.subr.mxu0 0.0
    %1309 = vmatpush1.msra.mxu0 0.0
    %1310 = vmatprep.subr.mxu0 0.0
    %1311 = vmatpush1.msra.mxu0 0.0
    %1312 = vmatprep.subr.mxu0 0.0
    %1313 = vmatpush1.msra.mxu0 0.0
    %1314 = vmatprep.subr.mxu0 0.0
    %1315 = vmatpush1.msra.mxu0 0.0
    %1316 = vmatprep.subr.mxu0 0.0
    %1317 = vmatpush1.msra.mxu0 0.0
    %1318 = vmatprep.subr.mxu0 0.0
    %1319 = vmatpush1.msra.mxu0 0.0
    %1320 = vmatprep.subr.mxu0 0.0
    %1321 = vmatpush1.msra.mxu0 0.0
    %1322 = vmatprep.subr.mxu0 0.0
    %1323 = vmatpush1.msra.mxu0 0.0
    %1324 = vmatprep.subr.mxu0 0.0
    %1325 = vmatpush1.msra.mxu0 0.0
    %1326 = vmatprep.subr.mxu0 0.0
    %1327 = vmatpush1.msra.mxu0 0.0
    %1328 = vmatprep.subr.mxu0 0.0
    %1329 = vmatpush1.msra.mxu0 0.0
    %1330 = vmatprep.subr.mxu0 0.0
    %1331 = vmatpush1.msra.mxu0 0.0
    %1332 = vmatprep.subr.mxu0 0.0
    %1333 = vmatpush1.msra.mxu0 0.0
    %1334 = vmatprep.subr.mxu0 0.0
    %1335 = vmatpush1.msra.mxu0 0.0
    %1336 = vmatprep.subr.mxu0 0.0
    %1337 = vmatpush1.msra.mxu0 0.0
    %1338 = vmatprep.subr.mxu0 0.0
    %1339 = vmatpush1.msra.mxu0 0.0
    %1340 = vmatprep.mubr.f32.mxu0 0.0
    %1341 = vmatmul.mubr.f32.gmra.mrb[0].mxu0 %v1265
    %v1342 = vpop.f32.mrb[0].mxu0
    %v1343 = vadd.f32 0.0, %v1342
    %v1344 = vpop.f32.mrb[0].mxu0
    %1345 = vmatprep.mubr.f32.mxu0 0.0
    %1346 = vmatmul.mubr.f32.gmra.mrb[0].mxu0 %v1268
    %v1347 = vpop.f32.mrb[0].mxu0
    %v1348 = vadd.f32 0.0, %v1347
    %v1349 = vpop.f32.mrb[0].mxu0
    %1350 = vmatprep.mubr.f32.mxu0 0.0
    %1351 = vmatmul.mubr.f32.gmra.mrb[0].mxu0 %v1271
    %v1352 = vpop.f32.mrb[0].mxu0
    %v1353 = vadd.f32 0.0, %v1352
    %v1354 = vpop.f32.mrb[0].mxu0
    %1355 = vmatprep.mubr.f32.mxu0 0.0
    %1356 = vmatmul.mubr.f32.gmra.mrb[0].mxu0 %v1274
    %v1357 = vpop.f32.mrb[0].mxu0
    %v1358 = vadd.f32 0.0, %v1357
    %v1359 = vpop.f32.mrb[0].mxu0
    %1360 = vdwg.mxu0
    %v1362 = vsel %vm124, %v927, 0
    %v1365 = vsel %vm124, %v934, 0
    %v1368 = vsel %vm124, %v941, 0
    %v1371 = vsel %vm124, %v948, 0
    %1373 = vmatprep.subr.mxu0 0.0
    %1374 = vmatpush1.msra.mxu0 %v81
    %1375 = vmatprep.subr.mxu0 0.0
    %1376 = vmatpush1.msra.mxu0 %v82
    %1377 = vmatprep.subr.mxu0 0.0
    %1378 = vmatpush1.msra.mxu0 %v83
    %1379 = vmatprep.subr.mxu0 0.0
    %1380 = vmatpush1.msra.mxu0 %v84
    %1381 = vmatprep.subr.mxu0 0.0
    %1382 = vmatpush1.msra.mxu0 0.0
    %1383 = vmatprep.subr.mxu0 0.0
    %1384 = vmatpush1.msra.mxu0 0.0
    %1385 = vmatprep.subr.mxu0 0.0
    %1386 = vmatpush1.msra.mxu0 0.0
    %1387 = vmatprep.subr.mxu0 0.0
    %1388 = vmatpush1.msra.mxu0 0.0
    %1389 = vmatprep.subr.mxu0 0.0
    %1390 = vmatpush1.msra.mxu0 0.0
    %1391 = vmatprep.subr.mxu0 0.0
    %1392 = vmatpush1.msra.mxu0 0.0
    %1393 = vmatprep.subr.mxu0 0.0
    %1394 = vmatpush1.msra.mxu0 0.0
    %1395 = vmatprep.subr.mxu0 0.0
    %1396 = vmatpush1.msra.mxu0 0.0
    %1397 = vmatprep.subr.mxu0 0.0
    %1398 = vmatpush1.msra.mxu0 0.0
    %1399 = vmatprep.subr.mxu0 0.0
    %1400 = vmatpush1.msra.mxu0 0.0
    %1401 = vmatprep.subr.mxu0 0.0
    %1402 = vmatpush1.msra.mxu0 0.0
    %1403 = vmatprep.subr.mxu0 0.0
    %1404 = vmatpush1.msra.mxu0 0.0
    %1405 = vmatprep.subr.mxu0 0.0
    %1406 = vmatpush1.msra.mxu0 0.0
    %1407 = vmatprep.subr.mxu0 0.0
    %1408 = vmatpush1.msra.mxu0 0.0
    %1409 = vmatprep.subr.mxu0 0.0
    %1410 = vmatpush1.msra.mxu0 0.0
    %1411 = vmatprep.subr.mxu0 0.0
    %1412 = vmatpush1.msra.mxu0 0.0
    %1413 = vmatprep.subr.mxu0 0.0
    %1414 = vmatpush1.msra.mxu0 0.0
    %1415 = vmatprep.subr.mxu0 0.0
    %1416 = vmatpush1.msra.mxu0 0.0
    %1417 = vmatprep.subr.mxu0 0.0
    %1418 = vmatpush1.msra.mxu0 0.0
    %1419 = vmatprep.subr.mxu0 0.0
    %1420 = vmatpush1.msra.mxu0 0.0
    %1421 = vmatprep.subr.mxu0 0.0
    %1422 = vmatpush1.msra.mxu0 0.0
    %1423 = vmatprep.subr.mxu0 0.0
    %1424 = vmatpush1.msra.mxu0 0.0
    %1425 = vmatprep.subr.mxu0 0.0
    %1426 = vmatpush1.msra.mxu0 0.0
    %1427 = vmatprep.subr.mxu0 0.0
    %1428 = vmatpush1.msra.mxu0 0.0
    %1429 = vmatprep.subr.mxu0 0.0
    %1430 = vmatpush1.msra.mxu0 0.0
    %1431 = vmatprep.subr.mxu0 0.0
    %1432 = vmatpush1.msra.mxu0 0.0
    %1433 = vmatprep.subr.mxu0 0.0
    %1434 = vmatpush1.msra.mxu0 0.0
    %1435 = vmatprep.subr.mxu0 0.0
    %1436 = vmatpush1.msra.mxu0 0.0
    %1437 = vmatprep.mubr.f32.mxu0 0.0
    %1438 = vmatmul.mubr.f32.gmra.mrb[0].mxu0 %v1362
    %v1439 = vpop.f32.mrb[0].mxu0
    %v1440 = vadd.f32 0.0, %v1439
    %v1441 = vpop.f32.mrb[0].mxu0
    %1442 = vmatprep.mubr.f32.mxu0 0.0
    %1443 = vmatmul.mubr.f32.gmra.mrb[0].mxu0 %v1365
    %v1444 = vpop.f32.mrb[0].mxu0
    %v1445 = vadd.f32 0.0, %v1444
    %v1446 = vpop.f32.mrb[0].mxu0
    %1447 = vmatprep.mubr.f32.mxu0 0.0
    %1448 = vmatmul.mubr.f32.gmra.mrb[0].mxu0 %v1368
    %v1449 = vpop.f32.mrb[0].mxu0
    %v1450 = vadd.f32 0.0, %v1449
    %v1451 = vpop.f32.mrb[0].mxu0
    %1452 = vmatprep.mubr.f32.mxu0 0.0
    %1453 = vmatmul.mubr.f32.gmra.mrb[0].mxu0 %v1371
    %v1454 = vpop.f32.mrb[0].mxu0
    %v1455 = vadd.f32 0.0, %v1454
    %v1456 = vpop.f32.mrb[0].mxu0
    %1457 = vdwg.mxu0
    %1458 = vmatprep.subr.mxu0 0.0
    %1459 = vmatpush1.msra.mxu0 %v76
    %1460 = vmatprep.subr.mxu0 0.0
    %1461 = vmatpush1.msra.mxu0 %v77
    %1462 = vmatprep.subr.mxu0 0.0
    %1463 = vmatpush1.msra.mxu0 %v78
    %1464 = vmatprep.subr.mxu0 0.0
    %1465 = vmatpush1.msra.mxu0 %v79
    %1466 = vmatprep.subr.mxu0 0.0
    %1467 = vmatpush1.msra.mxu0 0.0
    %1468 = vmatprep.subr.mxu0 0.0
    %1469 = vmatpush1.msra.mxu0 0.0
    %1470 = vmatprep.subr.mxu0 0.0
    %1471 = vmatpush1.msra.mxu0 0.0
    %1472 = vmatprep.subr.mxu0 0.0
    %1473 = vmatpush1.msra.mxu0 0.0
    %1474 = vmatprep.subr.mxu0 0.0
    %1475 = vmatpush1.msra.mxu0 0.0
    %1476 = vmatprep.subr.mxu0 0.0
    %1477 = vmatpush1.msra.mxu0 0.0
    %1478 = vmatprep.subr.mxu0 0.0
    %1479 = vmatpush1.msra.mxu0 0.0
    %1480 = vmatprep.subr.mxu0 0.0
    %1481 = vmatpush1.msra.mxu0 0.0
    %1482 = vmatprep.subr.mxu0 0.0
    %1483 = vmatpush1.msra.mxu0 0.0
    %1484 = vmatprep.subr.mxu0 0.0
    %1485 = vmatpush1.msra.mxu0 0.0
    %1486 = vmatprep.subr.mxu0 0.0
    %1487 = vmatpush1.msra.mxu0 0.0
    %1488 = vmatprep.subr.mxu0 0.0
    %1489 = vmatpush1.msra.mxu0 0.0
    %1490 = vmatprep.subr.mxu0 0.0
    %1491 = vmatpush1.msra.mxu0 0.0
    %1492 = vmatprep.subr.mxu0 0.0
    %1493 = vmatpush1.msra.mxu0 0.0
    %1494 = vmatprep.subr.mxu0 0.0
    %1495 = vmatpush1.msra.mxu0 0.0
    %1496 = vmatprep.subr.mxu0 0.0
    %1497 = vmatpush1.msra.mxu0 0.0
    %1498 = vmatprep.subr.mxu0 0.0
    %1499 = vmatpush1.msra.mxu0 0.0
    %1500 = vmatprep.subr.mxu0 0.0
    %1501 = vmatpush1.msra.mxu0 0.0
    %1502 = vmatprep.subr.mxu0 0.0
    %1503 = vmatpush1.msra.mxu0 0.0
    %1504 = vmatprep.subr.mxu0 0.0
    %1505 = vmatpush1.msra.mxu0 0.0
    %1506 = vmatprep.subr.mxu0 0.0
    %1507 = vmatpush1.msra.mxu0 0.0
    %1508 = vmatprep.subr.mxu0 0.0
    %1509 = vmatpush1.msra.mxu0 0.0
    %1510 = vmatprep.subr.mxu0 0.0
    %1511 = vmatpush1.msra.mxu0 0.0
    %1512 = vmatprep.subr.mxu0 0.0
    %1513 = vmatpush1.msra.mxu0 0.0
    %1514 = vmatprep.subr.mxu0 0.0
    %1515 = vmatpush1.msra.mxu0 0.0
    %1516 = vmatprep.subr.mxu0 0.0
    %1517 = vmatpush1.msra.mxu0 0.0
    %1518 = vmatprep.subr.mxu0 0.0
    %1519 = vmatpush1.msra.mxu0 0.0
    %1520 = vmatprep.subr.mxu0 0.0
    %1521 = vmatpush1.msra.mxu0 0.0
    %1522 = vmatprep.mubr.f32.mxu0 0.0
    %1523 = vmatmul.mubr.f32.gmra.mrb[0].mxu0 %v1362
    %v1524 = vpop.f32.mrb[0].mxu0
    %v1525 = vadd.f32 0.0, %v1524
    %v1526 = vpop.f32.mrb[0].mxu0
    %1527 = vmatprep.mubr.f32.mxu0 0.0
    %1528 = vmatmul.mubr.f32.gmra.mrb[0].mxu0 %v1365
    %v1529 = vpop.f32.mrb[0].mxu0
    %v1530 = vadd.f32 0.0, %v1529
    %v1531 = vpop.f32.mrb[0].mxu0
    %1532 = vmatprep.mubr.f32.mxu0 0.0
    %1533 = vmatmul.mubr.f32.gmra.mrb[0].mxu0 %v1368
    %v1534 = vpop.f32.mrb[0].mxu0
    %v1535 = vadd.f32 0.0, %v1534
    %v1536 = vpop.f32.mrb[0].mxu0
    %1537 = vmatprep.mubr.f32.mxu0 0.0
    %1538 = vmatmul.mubr.f32.gmra.mrb[0].mxu0 %v1371
    %v1539 = vpop.f32.mrb[0].mxu0
    %v1540 = vadd.f32 0.0, %v1539
    %v1541 = vpop.f32.mrb[0].mxu0
    %1542 = vdwg.mxu0
    %v1544 = vsel %vm124, %v1246, 0
    %v1547 = vsel %vm124, %v1251, 0
    %v1550 = vsel %vm124, %v1256, 0
    %v1553 = vsel %vm124, %v1261, 0
    %1555 = vmatprep.subr.mxu0 0.0
    %1556 = vmatpush1.msra.mxu0 %v81
    %1557 = vmatprep.subr.mxu0 0.0
    %1558 = vmatpush1.msra.mxu0 %v82
    %1559 = vmatprep.subr.mxu0 0.0
    %1560 = vmatpush1.msra.mxu0 %v83
    %1561 = vmatprep.subr.mxu0 0.0
    %1562 = vmatpush1.msra.mxu0 %v84
    %1563 = vmatprep.subr.mxu0 0.0
    %1564 = vmatpush1.msra.mxu0 0.0
    %1565 = vmatprep.subr.mxu0 0.0
    %1566 = vmatpush1.msra.mxu0 0.0
    %1567 = vmatprep.subr.mxu0 0.0
    %1568 = vmatpush1.msra.mxu0 0.0
    %1569 = vmatprep.subr.mxu0 0.0
    %1570 = vmatpush1.msra.mxu0 0.0
    %1571 = vmatprep.subr.mxu0 0.0
    %1572 = vmatpush1.msra.mxu0 0.0
    %1573 = vmatprep.subr.mxu0 0.0
    %1574 = vmatpush1.msra.mxu0 0.0
    %1575 = vmatprep.subr.mxu0 0.0
    %1576 = vmatpush1.msra.mxu0 0.0
    %1577 = vmatprep.subr.mxu0 0.0
    %1578 = vmatpush1.msra.mxu0 0.0
    %1579 = vmatprep.subr.mxu0 0.0
    %1580 = vmatpush1.msra.mxu0 0.0
    %1581 = vmatprep.subr.mxu0 0.0
    %1582 = vmatpush1.msra.mxu0 0.0
    %1583 = vmatprep.subr.mxu0 0.0
    %1584 = vmatpush1.msra.mxu0 0.0
    %1585 = vmatprep.subr.mxu0 0.0
    %1586 = vmatpush1.msra.mxu0 0.0
    %1587 = vmatprep.subr.mxu0 0.0
    %1588 = vmatpush1.msra.mxu0 0.0
    %1589 = vmatprep.subr.mxu0 0.0
    %1590 = vmatpush1.msra.mxu0 0.0
    %1591 = vmatprep.subr.mxu0 0.0
    %1592 = vmatpush1.msra.mxu0 0.0
    %1593 = vmatprep.subr.mxu0 0.0
    %1594 = vmatpush1.msra.mxu0 0.0
    %1595 = vmatprep.subr.mxu0 0.0
    %1596 = vmatpush1.msra.mxu0 0.0
    %1597 = vmatprep.subr.mxu0 0.0
    %1598 = vmatpush1.msra.mxu0 0.0
    %1599 = vmatprep.subr.mxu0 0.0
    %1600 = vmatpush1.msra.mxu0 0.0
    %1601 = vmatprep.subr.mxu0 0.0
    %1602 = vmatpush1.msra.mxu0 0.0
    %1603 = vmatprep.subr.mxu0 0.0
    %1604 = vmatpush1.msra.mxu0 0.0
    %1605 = vmatprep.subr.mxu0 0.0
    %1606 = vmatpush1.msra.mxu0 0.0
    %1607 = vmatprep.subr.mxu0 0.0
    %1608 = vmatpush1.msra.mxu0 0.0
    %1609 = vmatprep.subr.mxu0 0.0
    %1610 = vmatpush1.msra.mxu0 0.0
    %1611 = vmatprep.subr.mxu0 0.0
    %1612 = vmatpush1.msra.mxu0 0.0
    %1613 = vmatprep.subr.mxu0 0.0
    %1614 = vmatpush1.msra.mxu0 0.0
    %1615 = vmatprep.subr.mxu0 0.0
    %1616 = vmatpush1.msra.mxu0 0.0
    %1617 = vmatprep.subr.mxu0 0.0
    %1618 = vmatpush1.msra.mxu0 0.0
    %1619 = vmatprep.mubr.f32.mxu0 0.0
    %1620 = vmatmul.mubr.f32.gmra.mrb[0].mxu0 %v1544
    %v1621 = vpop.f32.mrb[0].mxu0
    %v1622 = vadd.f32 0.0, %v1621
    %v1623 = vpop.f32.mrb[0].mxu0
    %1624 = vmatprep.mubr.f32.mxu0 0.0
    %1625 = vmatmul.mubr.f32.gmra.mrb[0].mxu0 %v1547
    %v1626 = vpop.f32.mrb[0].mxu0
    %v1627 = vadd.f32 0.0, %v1626
    %v1628 = vpop.f32.mrb[0].mxu0
    %1629 = vmatprep.mubr.f32.mxu0 0.0
    %1630 = vmatmul.mubr.f32.gmra.mrb[0].mxu0 %v1550
    %v1631 = vpop.f32.mrb[0].mxu0
    %v1632 = vadd.f32 0.0, %v1631
    %v1633 = vpop.f32.mrb[0].mxu0
    %1634 = vmatprep.mubr.f32.mxu0 0.0
    %1635 = vmatmul.mubr.f32.gmra.mrb[0].mxu0 %v1553
    %v1636 = vpop.f32.mrb[0].mxu0
    %v1637 = vadd.f32 0.0, %v1636
    %v1638 = vpop.f32.mrb[0].mxu0
    %1639 = vdwg.mxu0
    %1640 = vmatprep.subr.mxu0 0.0
    %1641 = vmatpush1.msra.mxu0 %v76
    %1642 = vmatprep.subr.mxu0 0.0
    %1643 = vmatpush1.msra.mxu0 %v77
    %1644 = vmatprep.subr.mxu0 0.0
    %1645 = vmatpush1.msra.mxu0 %v78
    %1646 = vmatprep.subr.mxu0 0.0
    %1647 = vmatpush1.msra.mxu0 %v79
    %1648 = vmatprep.subr.mxu0 0.0
    %1649 = vmatpush1.msra.mxu0 0.0
    %1650 = vmatprep.subr.mxu0 0.0
    %1651 = vmatpush1.msra.mxu0 0.0
    %1652 = vmatprep.subr.mxu0 0.0
    %1653 = vmatpush1.msra.mxu0 0.0
    %1654 = vmatprep.subr.mxu0 0.0
    %1655 = vmatpush1.msra.mxu0 0.0
    %1656 = vmatprep.subr.mxu0 0.0
    %1657 = vmatpush1.msra.mxu0 0.0
    %1658 = vmatprep.subr.mxu0 0.0
    %1659 = vmatpush1.msra.mxu0 0.0
    %1660 = vmatprep.subr.mxu0 0.0
    %1661 = vmatpush1.msra.mxu0 0.0
    %1662 = vmatprep.subr.mxu0 0.0
    %1663 = vmatpush1.msra.mxu0 0.0
    %1664 = vmatprep.subr.mxu0 0.0
    %1665 = vmatpush1.msra.mxu0 0.0
    %1666 = vmatprep.subr.mxu0 0.0
    %1667 = vmatpush1.msra.mxu0 0.0
    %1668 = vmatprep.subr.mxu0 0.0
    %1669 = vmatpush1.msra.mxu0 0.0
    %1670 = vmatprep.subr.mxu0 0.0
    %1671 = vmatpush1.msra.mxu0 0.0
    %1672 = vmatprep.subr.mxu0 0.0
    %1673 = vmatpush1.msra.mxu0 0.0
    %1674 = vmatprep.subr.mxu0 0.0
    %1675 = vmatpush1.msra.mxu0 0.0
    %1676 = vmatprep.subr.mxu0 0.0
    %1677 = vmatpush1.msra.mxu0 0.0
    %1678 = vmatprep.subr.mxu0 0.0
    %1679 = vmatpush1.msra.mxu0 0.0
    %1680 = vmatprep.subr.mxu0 0.0
    %1681 = vmatpush1.msra.mxu0 0.0
    %1682 = vmatprep.subr.mxu0 0.0
    %1683 = vmatpush1.msra.mxu0 0.0
    %1684 = vmatprep.subr.mxu0 0.0
    %1685 = vmatpush1.msra.mxu0 0.0
    %1686 = vmatprep.subr.mxu0 0.0
    %1687 = vmatpush1.msra.mxu0 0.0
    %1688 = vmatprep.subr.mxu0 0.0
    %1689 = vmatpush1.msra.mxu0 0.0
    %1690 = vmatprep.subr.mxu0 0.0
    %1691 = vmatpush1.msra.mxu0 0.0
    %1692 = vmatprep.subr.mxu0 0.0
    %1693 = vmatpush1.msra.mxu0 0.0
    %1694 = vmatprep.subr.mxu0 0.0
    %1695 = vmatpush1.msra.mxu0 0.0
    %1696 = vmatprep.subr.mxu0 0.0
    %1697 = vmatpush1.msra.mxu0 0.0
    %1698 = vmatprep.subr.mxu0 0.0
    %1699 = vmatpush1.msra.mxu0 0.0
    %1700 = vmatprep.subr.mxu0 0.0
    %1701 = vmatpush1.msra.mxu0 0.0
    %1702 = vmatprep.subr.mxu0 0.0
    %1703 = vmatpush1.msra.mxu0 0.0
    %1704 = vmatprep.mubr.f32.mxu0 0.0
    %1705 = vmatmul.mubr.f32.gmra.mrb[0].mxu0 %v1544
    %v1706 = vpop.f32.mrb[0].mxu0
    %v1707 = vadd.f32 0.0, %v1706
    %v1708 = vpop.f32.mrb[0].mxu0
    %1709 = vmatprep.mubr.f32.mxu0 0.0
    %1710 = vmatmul.mubr.f32.gmra.mrb[0].mxu0 %v1547
    %v1711 = vpop.f32.mrb[0].mxu0
    %v1712 = vadd.f32 0.0, %v1711
    %v1713 = vpop.f32.mrb[0].mxu0
    %1714 = vmatprep.mubr.f32.mxu0 0.0
    %1715 = vmatmul.mubr.f32.gmra.mrb[0].mxu0 %v1550
    %v1716 = vpop.f32.mrb[0].mxu0
    %v1717 = vadd.f32 0.0, %v1716
    %v1718 = vpop.f32.mrb[0].mxu0
    %1719 = vmatprep.mubr.f32.mxu0 0.0
    %1720 = vmatmul.mubr.f32.gmra.mrb[0].mxu0 %v1553
    %v1721 = vpop.f32.mrb[0].mxu0
    %v1722 = vadd.f32 0.0, %v1721
    %v1723 = vpop.f32.mrb[0].mxu0
    %1724 = vdwg.mxu0
    %v1726 = vsel %vm124, %v1343, 0
    %v1729 = vsel %vm124, %v1348, 0
    %v1732 = vsel %vm124, %v1353, 0
    %v1735 = vsel %vm124, %v1358, 0
    %1737 = vmatprep.subr.mxu0 0.0
    %1738 = vmatpush1.msra.mxu0 %v81
    %1739 = vmatprep.subr.mxu0 0.0
    %1740 = vmatpush1.msra.mxu0 %v82
    %1741 = vmatprep.subr.mxu0 0.0
    %1742 = vmatpush1.msra.mxu0 %v83
    %1743 = vmatprep.subr.mxu0 0.0
    %1744 = vmatpush1.msra.mxu0 %v84
    %1745 = vmatprep.subr.mxu0 0.0
    %1746 = vmatpush1.msra.mxu0 0.0
    %1747 = vmatprep.subr.mxu0 0.0
    %1748 = vmatpush1.msra.mxu0 0.0
    %1749 = vmatprep.subr.mxu0 0.0
    %1750 = vmatpush1.msra.mxu0 0.0
    %1751 = vmatprep.subr.mxu0 0.0
    %1752 = vmatpush1.msra.mxu0 0.0
    %1753 = vmatprep.subr.mxu0 0.0
    %1754 = vmatpush1.msra.mxu0 0.0
    %1755 = vmatprep.subr.mxu0 0.0
    %1756 = vmatpush1.msra.mxu0 0.0
    %1757 = vmatprep.subr.mxu0 0.0
    %1758 = vmatpush1.msra.mxu0 0.0
    %1759 = vmatprep.subr.mxu0 0.0
    %1760 = vmatpush1.msra.mxu0 0.0
    %1761 = vmatprep.subr.mxu0 0.0
    %1762 = vmatpush1.msra.mxu0 0.0
    %1763 = vmatprep.subr.mxu0 0.0
    %1764 = vmatpush1.msra.mxu0 0.0
    %1765 = vmatprep.subr.mxu0 0.0
    %1766 = vmatpush1.msra.mxu0 0.0
    %1767 = vmatprep.subr.mxu0 0.0
    %1768 = vmatpush1.msra.mxu0 0.0
    %1769 = vmatprep.subr.mxu0 0.0
    %1770 = vmatpush1.msra.mxu0 0.0
    %1771 = vmatprep.subr.mxu0 0.0
    %1772 = vmatpush1.msra.mxu0 0.0
    %1773 = vmatprep.subr.mxu0 0.0
    %1774 = vmatpush1.msra.mxu0 0.0
    %1775 = vmatprep.subr.mxu0 0.0
    %1776 = vmatpush1.msra.mxu0 0.0
    %1777 = vmatprep.subr.mxu0 0.0
    %1778 = vmatpush1.msra.mxu0 0.0
    %1779 = vmatprep.subr.mxu0 0.0
    %1780 = vmatpush1.msra.mxu0 0.0
    %1781 = vmatprep.subr.mxu0 0.0
    %1782 = vmatpush1.msra.mxu0 0.0
    %1783 = vmatprep.subr.mxu0 0.0
    %1784 = vmatpush1.msra.mxu0 0.0
    %1785 = vmatprep.subr.mxu0 0.0
    %1786 = vmatpush1.msra.mxu0 0.0
    %1787 = vmatprep.subr.mxu0 0.0
    %1788 = vmatpush1.msra.mxu0 0.0
    %1789 = vmatprep.subr.mxu0 0.0
    %1790 = vmatpush1.msra.mxu0 0.0
    %1791 = vmatprep.subr.mxu0 0.0
    %1792 = vmatpush1.msra.mxu0 0.0
    %1793 = vmatprep.subr.mxu0 0.0
    %1794 = vmatpush1.msra.mxu0 0.0
    %1795 = vmatprep.subr.mxu0 0.0
    %1796 = vmatpush1.msra.mxu0 0.0
    %1797 = vmatprep.subr.mxu0 0.0
    %1798 = vmatpush1.msra.mxu0 0.0
    %1799 = vmatprep.subr.mxu0 0.0
    %1800 = vmatpush1.msra.mxu0 0.0
    %1801 = vmatprep.mubr.f32.mxu0 0.0
    %1802 = vmatmul.mubr.f32.gmra.mrb[0].mxu0 %v1726
    %v1803 = vpop.f32.mrb[0].mxu0
    %v1804 = vadd.f32 0.0, %v1803
    %v1805 = vpop.f32.mrb[0].mxu0
    %1806 = vmatprep.mubr.f32.mxu0 0.0
    %1807 = vmatmul.mubr.f32.gmra.mrb[0].mxu0 %v1729
    %v1808 = vpop.f32.mrb[0].mxu0
    %v1809 = vadd.f32 0.0, %v1808
    %v1810 = vpop.f32.mrb[0].mxu0
    %1811 = vmatprep.mubr.f32.mxu0 0.0
    %1812 = vmatmul.mubr.f32.gmra.mrb[0].mxu0 %v1732
    %v1813 = vpop.f32.mrb[0].mxu0
    %v1814 = vadd.f32 0.0, %v1813
    %v1815 = vpop.f32.mrb[0].mxu0
    %1816 = vmatprep.mubr.f32.mxu0 0.0
    %1817 = vmatmul.mubr.f32.gmra.mrb[0].mxu0 %v1735
    %v1818 = vpop.f32.mrb[0].mxu0
    %v1819 = vadd.f32 0.0, %v1818
    %v1820 = vpop.f32.mrb[0].mxu0
    %1821 = vdwg.mxu0
    %1822 = vmatprep.subr.mxu0 0.0
    %1823 = vmatpush1.msra.mxu0 %v76
    %1824 = vmatprep.subr.mxu0 0.0
    %1825 = vmatpush1.msra.mxu0 %v77
    %1826 = vmatprep.subr.mxu0 0.0
    %1827 = vmatpush1.msra.mxu0 %v78
    %1828 = vmatprep.subr.mxu0 0.0
    %1829 = vmatpush1.msra.mxu0 %v79
    %1830 = vmatprep.subr.mxu0 0.0
    %1831 = vmatpush1.msra.mxu0 0.0
    %1832 = vmatprep.subr.mxu0 0.0
    %1833 = vmatpush1.msra.mxu0 0.0
    %1834 = vmatprep.subr.mxu0 0.0
    %1835 = vmatpush1.msra.mxu0 0.0
    %1836 = vmatprep.subr.mxu0 0.0
    %1837 = vmatpush1.msra.mxu0 0.0
    %1838 = vmatprep.subr.mxu0 0.0
    %1839 = vmatpush1.msra.mxu0 0.0
    %1840 = vmatprep.subr.mxu0 0.0
    %1841 = vmatpush1.msra.mxu0 0.0
    %1842 = vmatprep.subr.mxu0 0.0
    %1843 = vmatpush1.msra.mxu0 0.0
    %1844 = vmatprep.subr.mxu0 0.0
    %1845 = vmatpush1.msra.mxu0 0.0
    %1846 = vmatprep.subr.mxu0 0.0
    %1847 = vmatpush1.msra.mxu0 0.0
    %1848 = vmatprep.subr.mxu0 0.0
    %1849 = vmatpush1.msra.mxu0 0.0
    %1850 = vmatprep.subr.mxu0 0.0
    %1851 = vmatpush1.msra.mxu0 0.0
    %1852 = vmatprep.subr.mxu0 0.0
    %1853 = vmatpush1.msra.mxu0 0.0
    %1854 = vmatprep.subr.mxu0 0.0
    %1855 = vmatpush1.msra.mxu0 0.0
    %1856 = vmatprep.subr.mxu0 0.0
    %1857 = vmatpush1.msra.mxu0 0.0
    %1858 = vmatprep.subr.mxu0 0.0
    %1859 = vmatpush1.msra.mxu0 0.0
    %1860 = vmatprep.subr.mxu0 0.0
    %1861 = vmatpush1.msra.mxu0 0.0
    %1862 = vmatprep.subr.mxu0 0.0
    %1863 = vmatpush1.msra.mxu0 0.0
    %1864 = vmatprep.subr.mxu0 0.0
    %1865 = vmatpush1.msra.mxu0 0.0
    %1866 = vmatprep.subr.mxu0 0.0
    %1867 = vmatpush1.msra.mxu0 0.0
    %1868 = vmatprep.subr.mxu0 0.0
    %1869 = vmatpush1.msra.mxu0 0.0
    %1870 = vmatprep.subr.mxu0 0.0
    %1871 = vmatpush1.msra.mxu0 0.0
    %1872 = vmatprep.subr.mxu0 0.0
    %1873 = vmatpush1.msra.mxu0 0.0
    %1874 = vmatprep.subr.mxu0 0.0
    %1875 = vmatpush1.msra.mxu0 0.0
    %1876 = vmatprep.subr.mxu0 0.0
    %1877 = vmatpush1.msra.mxu0 0.0
    %1878 = vmatprep.subr.mxu0 0.0
    %1879 = vmatpush1.msra.mxu0 0.0
    %1880 = vmatprep.subr.mxu0 0.0
    %1881 = vmatpush1.msra.mxu0 0.0
    %1882 = vmatprep.subr.mxu0 0.0
    %1883 = vmatpush1.msra.mxu0 0.0
    %1884 = vmatprep.subr.mxu0 0.0
    %1885 = vmatpush1.msra.mxu0 0.0
    %1886 = vmatprep.mubr.f32.mxu0 0.0
    %1887 = vmatmul.mubr.f32.gmra.mrb[0].mxu0 %v1726
    %v1888 = vpop.f32.mrb[0].mxu0
    %v1889 = vadd.f32 0.0, %v1888
    %v1890 = vpop.f32.mrb[0].mxu0
    %1891 = vmatprep.mubr.f32.mxu0 0.0
    %1892 = vmatmul.mubr.f32.gmra.mrb[0].mxu0 %v1729
    %v1893 = vpop.f32.mrb[0].mxu0
    %v1894 = vadd.f32 0.0, %v1893
    %v1895 = vpop.f32.mrb[0].mxu0
    %1896 = vmatprep.mubr.f32.mxu0 0.0
    %1897 = vmatmul.mubr.f32.gmra.mrb[0].mxu0 %v1732
    %v1898 = vpop.f32.mrb[0].mxu0
    %v1899 = vadd.f32 0.0, %v1898
    %v1900 = vpop.f32.mrb[0].mxu0
    %1901 = vmatprep.mubr.f32.mxu0 0.0
    %1902 = vmatmul.mubr.f32.gmra.mrb[0].mxu0 %v1735
    %v1903 = vpop.f32.mrb[0].mxu0
    %v1904 = vadd.f32 0.0, %v1903
    %v1905 = vpop.f32.mrb[0].mxu0
    %1906 = vdwg.mxu0
    %vm1907 = vcmp.ge.f32.partialorder %v879, 0.0
    %vm1908 = vcmp.ge.f32.partialorder %v884, 0.0
    %vm1909 = vcmp.ge.f32.partialorder %v889, 0.0
    %vm1910 = vcmp.ge.f32.partialorder %v894, 0.0
    %vm1911 = vcmp.le.f32.partialorder %v879, 0.0
    %vm1912 = vcmp.le.f32.partialorder %v884, 0.0
    %vm1913 = vcmp.le.f32.partialorder %v889, 0.0
    %vm1914 = vcmp.le.f32.partialorder %v894, 0.0
    %vm1915 = vcmp.ge.f32.partialorder %v685, 0.0
    %vm1916 = vcmp.ge.f32.partialorder %v690, 0.0
    %vm1917 = vcmp.ge.f32.partialorder %v695, 0.0
    %vm1918 = vcmp.ge.f32.partialorder %v700, 0.0
    %vm1919 = vcmp.le.f32.partialorder %v685, 0.0
    %vm1920 = vcmp.le.f32.partialorder %v690, 0.0
    %vm1921 = vcmp.le.f32.partialorder %v695, 0.0
    %vm1922 = vcmp.le.f32.partialorder %v700, 0.0
    %vm1923 = vcmp.ge.f32.partialorder %v897, %v901
    %vm1924 = vcmp.ge.f32.partialorder %v898, %v902
    %vm1925 = vcmp.ge.f32.partialorder %v899, %v903
    %vm1926 = vcmp.ge.f32.partialorder %v900, %v904
    %vm1927 = vcmp.le.f32.partialorder %v897, %v901
    %vm1928 = vcmp.le.f32.partialorder %v898, %v902
    %vm1929 = vcmp.le.f32.partialorder %v899, %v903
    %vm1930 = vcmp.le.f32.partialorder %v900, %v904
    %vm1931 = vmand %vm1907, %vm1915
    %vm1932 = vmand %vm1908, %vm1916
    %vm1933 = vmand %vm1909, %vm1917
    %vm1934 = vmand %vm1910, %vm1918
    %vm1935 = vmand %vm1911, %vm1919
    %vm1936 = vmand %vm1912, %vm1920
    %vm1937 = vmand %vm1913, %vm1921
    %vm1938 = vmand %vm1914, %vm1922
    %vm1939 = vmor %vm1931, %vm1935
    %vm1940 = vmor %vm1932, %vm1936
    %vm1941 = vmor %vm1933, %vm1937
    %vm1942 = vmor %vm1934, %vm1938
    %vm1943 = vmand %vm1911, %vm1915
    %vm1944 = vmand %vm1912, %vm1916
    %vm1945 = vmand %vm1913, %vm1917
    %vm1946 = vmand %vm1914, %vm1918
    %vm1947 = vmand %vm1907, %vm1919
    %vm1948 = vmand %vm1908, %vm1920
    %vm1949 = vmand %vm1909, %vm1921
    %vm1950 = vmand %vm1910, %vm1922
    %vm1951 = vmor %vm1943, %vm1947
    %vm1952 = vmor %vm1944, %vm1948
    %vm1953 = vmor %vm1945, %vm1949
    %vm1954 = vmor %vm1946, %vm1950
    %vm1955 = vmand %vm1163, %vm1939
    %vm1956 = vmand %vm1164, %vm1940
    %vm1957 = vmand %vm1165, %vm1941
    %vm1958 = vmand %vm1166, %vm1942
    %vm1959 = vmand %vm1955, %vm1923
    %vm1960 = vmand %vm1956, %vm1924
    %vm1961 = vmand %vm1957, %vm1925
    %vm1962 = vmand %vm1958, %vm1926
    %v1963 = vadd.f32 %v897, 1e-09
    %v1964 = vadd.f32 %v898, 1e-09
    %v1965 = vadd.f32 %v899, 1e-09
    %v1966 = vadd.f32 %v900, 1e-09
    %v1967 = vrcp.pop %v1963
    %v1968 = vrcp.pop %v1964
    %v1969 = vrcp.pop %v1965
    %v1970 = vrcp.pop %v1966
    %v1971 = vmul.f32 %v901, %v1967
    %v1972 = vmul.f32 %v902, %v1968
    %v1973 = vmul.f32 %v903, %v1969
    %v1974 = vmul.f32 %v904, %v1970
    %v1975 = vmul.f32 %v1622, %v1971
    %v1976 = vmul.f32 %v1627, %v1972
    %v1977 = vmul.f32 %v1632, %v1973
    %v1978 = vmul.f32 %v1637, %v1974
    %v1979 = vsub.f32 1.0, %v1971
    %v1980 = vsub.f32 1.0, %v1972
    %v1981 = vsub.f32 1.0, %v1973
    %v1982 = vsub.f32 1.0, %v1974
    %v1983 = vmul.f32 %v1246, %v1979
    %v1984 = vmul.f32 %v1251, %v1980
    %v1985 = vmul.f32 %v1256, %v1981
    %v1986 = vmul.f32 %v1261, %v1982
    %v1987 = vadd.f32 %v1975, %v1983
    %v1988 = vadd.f32 %v1976, %v1984
    %v1989 = vadd.f32 %v1977, %v1985
    %v1990 = vadd.f32 %v1978, %v1986
    %vm1991 = vcmp.le.f32.partialorder %v1987, %v927
    %vm1992 = vcmp.le.f32.partialorder %v1988, %v934
    %vm1993 = vcmp.le.f32.partialorder %v1989, %v941
    %vm1994 = vcmp.le.f32.partialorder %v1990, %v948
    %v1995 = vmul.f32 %v1889, %v1971
    %v1996 = vmul.f32 %v1894, %v1972
    %v1997 = vmul.f32 %v1899, %v1973
    %v1998 = vmul.f32 %v1904, %v1974
    %v1999 = vadd.f32 %v1995, %v1979
    %v2000 = vadd.f32 %v1996, %v1980
    %v2001 = vadd.f32 %v1997, %v1981
    %v2002 = vadd.f32 %v1998, %v1982
    %vm2003 = vcmp.le.f32.partialorder %v1999, %v927
    %vm2004 = vcmp.le.f32.partialorder %v2000, %v934
    %vm2005 = vcmp.le.f32.partialorder %v2001, %v941
    %vm2006 = vcmp.le.f32.partialorder %v2002, %v948
    %vm2007 = vmand %vm1991, %vm2003
    %vm2008 = vmand %vm1992, %vm2004
    %vm2009 = vmand %vm1993, %vm2005
    %vm2010 = vmand %vm1994, %vm2006
    %v2011 = vsel %vm2007, 1, 0
    %v2012 = vsel %vm2008, 1, 0
    %v2013 = vsel %vm2009, 1, 0
    %v2014 = vsel %vm2010, 1, 0
    %v2015 = vcvt.s32.f32 %v2011
    %v2016 = vcvt.s32.f32 %v2012
    %v2017 = vcvt.s32.f32 %v2013
    %v2018 = vcvt.s32.f32 %v2014
    %v2019 = vsel %vm1959, %v2015, 0.0
    %v2020 = vsel %vm1960, %v2016, 0.0
    %v2021 = vsel %vm1961, %v2017, 0.0
    %v2022 = vsel %vm1962, %v2018, 0.0
    %vm2023 = vmand %vm1955, %vm1927
    %vm2024 = vmand %vm1956, %vm1928
    %vm2025 = vmand %vm1957, %vm1929
    %vm2026 = vmand %vm1958, %vm1930
    %v2027 = vsel %vm2023, %v901, 1.0
    %v2028 = vsel %vm2024, %v902, 1.0
    %v2029 = vsel %vm2025, %v903, 1.0
    %v2030 = vsel %vm2026, %v904, 1.0
    %v2031 = vrcp.pop %v2027
    %v2032 = vrcp.pop %v2028
    %v2033 = vrcp.pop %v2029
    %v2034 = vrcp.pop %v2030
    %v2035 = vmul.f32 %v897, %v2031
    %v2036 = vmul.f32 %v898, %v2032
    %v2037 = vmul.f32 %v899, %v2033
    %v2038 = vmul.f32 %v900, %v2034
    %v2039 = vmul.f32 %v1622, %v2035
    %v2040 = vmul.f32 %v1627, %v2036
    %v2041 = vmul.f32 %v1632, %v2037
    %v2042 = vmul.f32 %v1637, %v2038
    %v2043 = vsub.f32 1.0, %v2035
    %v2044 = vsub.f32 1.0, %v2036
    %v2045 = vsub.f32 1.0, %v2037
    %v2046 = vsub.f32 1.0, %v2038
    %v2047 = vmul.f32 %v1440, %v2043
    %v2048 = vmul.f32 %v1445, %v2044
    %v2049 = vmul.f32 %v1450, %v2045
    %v2050 = vmul.f32 %v1455, %v2046
    %v2051 = vadd.f32 %v2039, %v2047
    %v2052 = vadd.f32 %v2040, %v2048
    %v2053 = vadd.f32 %v2041, %v2049
    %v2054 = vadd.f32 %v2042, %v2050
    %vm2055 = vcmp.le.f32.partialorder %v2051, %v927
    %vm2056 = vcmp.le.f32.partialorder %v2052, %v934
    %vm2057 = vcmp.le.f32.partialorder %v2053, %v941
    %vm2058 = vcmp.le.f32.partialorder %v2054, %v948
    %v2059 = vmul.f32 %v1889, %v2035
    %v2060 = vmul.f32 %v1894, %v2036
    %v2061 = vmul.f32 %v1899, %v2037
    %v2062 = vmul.f32 %v1904, %v2038
    %v2063 = vmul.f32 %v1525, %v2043
    %v2064 = vmul.f32 %v1530, %v2044
    %v2065 = vmul.f32 %v1535, %v2045
    %v2066 = vmul.f32 %v1540, %v2046
    %v2067 = vadd.f32 %v2059, %v2063
    %v2068 = vadd.f32 %v2060, %v2064
    %v2069 = vadd.f32 %v2061, %v2065
    %v2070 = vadd.f32 %v2062, %v2066
    %vm2071 = vcmp.le.f32.partialorder %v2067, %v927
    %vm2072 = vcmp.le.f32.partialorder %v2068, %v934
    %vm2073 = vcmp.le.f32.partialorder %v2069, %v941
    %vm2074 = vcmp.le.f32.partialorder %v2070, %v948
    %vm2075 = vmand %vm2055, %vm2071
    %vm2076 = vmand %vm2056, %vm2072
    %vm2077 = vmand %vm2057, %vm2073
    %vm2078 = vmand %vm2058, %vm2074
    %v2079 = vsel %vm2075, 1, 0
    %v2080 = vsel %vm2076, 1, 0
    %v2081 = vsel %vm2077, 1, 0
    %v2082 = vsel %vm2078, 1, 0
    %v2083 = vcvt.s32.f32 %v2079
    %v2084 = vcvt.s32.f32 %v2080
    %v2085 = vcvt.s32.f32 %v2081
    %v2086 = vcvt.s32.f32 %v2082
    %v2087 = vsel %vm2023, %v2083, %v2019
    %v2088 = vsel %vm2024, %v2084, %v2020
    %v2089 = vsel %vm2025, %v2085, %v2021
    %v2090 = vsel %vm2026, %v2086, %v2022
    %vm2091 = vmand %vm1163, %vm1951
    %vm2092 = vmand %vm1164, %vm1952
    %vm2093 = vmand %vm1165, %vm1953
    %vm2094 = vmand %vm1166, %vm1954
    %vm2095 = vmand %vm2091, %vm1927
    %vm2096 = vmand %vm2092, %vm1928
    %vm2097 = vmand %vm2093, %vm1929
    %vm2098 = vmand %vm2094, %vm1930
    %v2099 = vsel %vm2095, %v901, 1.0
    %v2100 = vsel %vm2096, %v902, 1.0
    %v2101 = vsel %vm2097, %v903, 1.0
    %v2102 = vsel %vm2098, %v904, 1.0
    %v2103 = vrcp.pop %v2099
    %v2104 = vrcp.pop %v2100
    %v2105 = vrcp.pop %v2101
    %v2106 = vrcp.pop %v2102
    %v2107 = vmul.f32 %v897, %v2103
    %v2108 = vmul.f32 %v898, %v2104
    %v2109 = vmul.f32 %v899, %v2105
    %v2110 = vmul.f32 %v900, %v2106
    %v2111 = vmul.f32 %v1804, %v2107
    %v2112 = vmul.f32 %v1809, %v2108
    %v2113 = vmul.f32 %v1814, %v2109
    %v2114 = vmul.f32 %v1819, %v2110
    %v2115 = vsub.f32 1.0, %v2107
    %v2116 = vsub.f32 1.0, %v2108
    %v2117 = vsub.f32 1.0, %v2109
    %v2118 = vsub.f32 1.0, %v2110
    %v2119 = vmul.f32 %v1440, %v2115
    %v2120 = vmul.f32 %v1445, %v2116
    %v2121 = vmul.f32 %v1450, %v2117
    %v2122 = vmul.f32 %v1455, %v2118
    %v2123 = vadd.f32 %v2111, %v2119
    %v2124 = vadd.f32 %v2112, %v2120
    %v2125 = vadd.f32 %v2113, %v2121
    %v2126 = vadd.f32 %v2114, %v2122
    %vm2127 = vcmp.le.f32.partialorder %v2123, %v927
    %vm2128 = vcmp.le.f32.partialorder %v2124, %v934
    %vm2129 = vcmp.le.f32.partialorder %v2125, %v941
    %vm2130 = vcmp.le.f32.partialorder %v2126, %v948
    %v2131 = vmul.f32 %v1707, %v2107
    %v2132 = vmul.f32 %v1712, %v2108
    %v2133 = vmul.f32 %v1717, %v2109
    %v2134 = vmul.f32 %v1722, %v2110
    %v2135 = vmul.f32 %v1525, %v2115
    %v2136 = vmul.f32 %v1530, %v2116
    %v2137 = vmul.f32 %v1535, %v2117
    %v2138 = vmul.f32 %v1540, %v2118
    %v2139 = vadd.f32 %v2131, %v2135
    %v2140 = vadd.f32 %v2132, %v2136
    %v2141 = vadd.f32 %v2133, %v2137
    %v2142 = vadd.f32 %v2134, %v2138
    %vm2143 = vcmp.le.f32.partialorder %v2139, %v927
    %vm2144 = vcmp.le.f32.partialorder %v2140, %v934
    %vm2145 = vcmp.le.f32.partialorder %v2141, %v941
    %vm2146 = vcmp.le.f32.partialorder %v2142, %v948
    %vm2147 = vmand %vm2127, %vm2143
    %vm2148 = vmand %vm2128, %vm2144
    %vm2149 = vmand %vm2129, %vm2145
    %vm2150 = vmand %vm2130, %vm2146
    %v2151 = vsel %vm2147, 1, 0
    %v2152 = vsel %vm2148, 1, 0
    %v2153 = vsel %vm2149, 1, 0
    %v2154 = vsel %vm2150, 1, 0
    %v2155 = vcvt.s32.f32 %v2151
    %v2156 = vcvt.s32.f32 %v2152
    %v2157 = vcvt.s32.f32 %v2153
    %v2158 = vcvt.s32.f32 %v2154
    %v2159 = vsel %vm2095, %v2155, %v2087
    %v2160 = vsel %vm2096, %v2156, %v2088
    %v2161 = vsel %vm2097, %v2157, %v2089
    %v2162 = vsel %vm2098, %v2158, %v2090
    %vm2163 = vmand %vm2091, %vm1923
    %vm2164 = vmand %vm2092, %vm1924
    %vm2165 = vmand %vm2093, %vm1925
    %vm2166 = vmand %vm2094, %vm1926
    %v2167 = vsel %vm2163, %v897, 1.0
    %v2168 = vsel %vm2164, %v898, 1.0
    %v2169 = vsel %vm2165, %v899, 1.0
    %v2170 = vsel %vm2166, %v900, 1.0
    %v2171 = vrcp.pop %v2167
    %v2172 = vrcp.pop %v2168
    %v2173 = vrcp.pop %v2169
    %v2174 = vrcp.pop %v2170
    %v2175 = vmul.f32 %v901, %v2171
    %v2176 = vmul.f32 %v902, %v2172
    %v2177 = vmul.f32 %v903, %v2173
    %v2178 = vmul.f32 %v904, %v2174
    %v2179 = vmul.f32 %v1804, %v2175
    %v2180 = vmul.f32 %v1809, %v2176
    %v2181 = vmul.f32 %v1814, %v2177
    %v2182 = vmul.f32 %v1819, %v2178
    %v2183 = vsub.f32 1.0, %v2175
    %v2184 = vsub.f32 1.0, %v2176
    %v2185 = vsub.f32 1.0, %v2177
    %v2186 = vsub.f32 1.0, %v2178
    %v2187 = vmul.f32 %v1343, %v2183
    %v2188 = vmul.f32 %v1348, %v2184
    %v2189 = vmul.f32 %v1353, %v2185
    %v2190 = vmul.f32 %v1358, %v2186
    %v2191 = vadd.f32 %v2179, %v2187
    %v2192 = vadd.f32 %v2180, %v2188
    %v2193 = vadd.f32 %v2181, %v2189
    %v2194 = vadd.f32 %v2182, %v2190
    %vm2195 = vcmp.le.f32.partialorder %v2191, %v927
    %vm2196 = vcmp.le.f32.partialorder %v2192, %v934
    %vm2197 = vcmp.le.f32.partialorder %v2193, %v941
    %vm2198 = vcmp.le.f32.partialorder %v2194, %v948
    %v2199 = vmul.f32 %v1707, %v2175
    %v2200 = vmul.f32 %v1712, %v2176
    %v2201 = vmul.f32 %v1717, %v2177
    %v2202 = vmul.f32 %v1722, %v2178
    %v2203 = vmul.f32 %v1246, %v2183
    %v2204 = vmul.f32 %v1251, %v2184
    %v2205 = vmul.f32 %v1256, %v2185
    %v2206 = vmul.f32 %v1261, %v2186
    %v2207 = vadd.f32 %v2199, %v2203
    %v2208 = vadd.f32 %v2200, %v2204
    %v2209 = vadd.f32 %v2201, %v2205
    %v2210 = vadd.f32 %v2202, %v2206
    %vm2211 = vcmp.le.f32.partialorder %v2207, %v927
    %vm2212 = vcmp.le.f32.partialorder %v2208, %v934
    %vm2213 = vcmp.le.f32.partialorder %v2209, %v941
    %vm2214 = vcmp.le.f32.partialorder %v2210, %v948
    %vm2215 = vmand %vm2195, %vm2211
    %vm2216 = vmand %vm2196, %vm2212
    %vm2217 = vmand %vm2197, %vm2213
    %vm2218 = vmand %vm2198, %vm2214
    %v2219 = vsel %vm2215, 1, 0
    %v2220 = vsel %vm2216, 1, 0
    %v2221 = vsel %vm2217, 1, 0
    %v2222 = vsel %vm2218, 1, 0
    %v2223 = vcvt.s32.f32 %v2219
    %v2224 = vcvt.s32.f32 %v2220
    %v2225 = vcvt.s32.f32 %v2221
    %v2226 = vcvt.s32.f32 %v2222
    %v2227 = vsel %vm2163, %v2223, %v2159
    %v2228 = vsel %vm2164, %v2224, %v2160
    %v2229 = vsel %vm2165, %v2225, %v2161
    %v2230 = vsel %vm2166, %v2226, %v2162
    %vm2231 = vcmp.eq.f32.partialorder %v2227, 1.0
    %vm2232 = vcmp.eq.f32.partialorder %v2228, 1.0
    %vm2233 = vcmp.eq.f32.partialorder %v2229, 1.0
    %vm2234 = vcmp.eq.f32.partialorder %v2230, 1.0
    %vm2235 = vcmp.ge.f32.partialorder %v927, 0.2
    %vm2236 = vcmp.ge.f32.partialorder %v934, 0.2
    %vm2237 = vcmp.ge.f32.partialorder %v941, 0.2
    %vm2238 = vcmp.ge.f32.partialorder %v948, 0.2
    %vm2239 = vmand %vm2231, %vm2235
    %vm2240 = vmand %vm2232, %vm2236
    %vm2241 = vmand %vm2233, %vm2237
    %vm2242 = vmand %vm2234, %vm2238
    %v2243 = vsel %vm2239, 1, 0
    %v2244 = vsel %vm2240, 1, 0
    %v2245 = vsel %vm2241, 1, 0
    %v2246 = vsel %vm2242, 1, 0
    %v2247 = vcvt.s32.f32 %v2243
    %v2248 = vcvt.s32.f32 %v2244
    %v2249 = vcvt.s32.f32 %v2245
    %v2250 = vcvt.s32.f32 %v2246
    %vm2251 = vcmp.ge.f32.partialorder %v927, 0.1
    %vm2252 = vcmp.ge.f32.partialorder %v934, 0.1
    %vm2253 = vcmp.ge.f32.partialorder %v941, 0.1
    %vm2254 = vcmp.ge.f32.partialorder %v948, 0.1
    %vm2255 = vmand %vm2231, %vm2251
    %vm2256 = vmand %vm2232, %vm2252
    %vm2257 = vmand %vm2233, %vm2253
    %vm2258 = vmand %vm2234, %vm2254
    %v2259 = vsel %vm2255, 1, 0
    %v2260 = vsel %vm2256, 1, 0
    %v2261 = vsel %vm2257, 1, 0
    %v2262 = vsel %vm2258, 1, 0
    %v2263 = vcvt.s32.f32 %v2259
    %v2264 = vcvt.s32.f32 %v2260
    %v2265 = vcvt.s32.f32 %v2261
    %v2266 = vcvt.s32.f32 %v2262
    loop: start=0, step=1, limit=128
    $region26: #{cifarnet_forward.1} parent=1 // loop_pre_header
      _
    $region27: #{cifarnet_forward.1} parent=1 // loop_header
      %s2268 = sphi 0, %s2272
      %p2269 = scmp.ge.s32.totalorder %s2268, 128
      %v2273 = vphi %v2247, %v2463
      %v2274 = vphi %v2248, %v2464
      %v2275 = vphi %v2249, %v2465
      %v2276 = vphi %v2250, %v2466
    $region28: #{cifarnet_forward.1} parent=1 // loop_header_branch
      %2271 = sbr.rel (%p2269) target = $region32
    $region29: #{cifarnet_forward.1} parent=1 // loop_body
      %2277 = vmatprep.subr.mxu0 0.0
      %2278 = vmatpush1.msra.mxu0 %v2273
      %2279 = vmatprep.subr.mxu0 0.0
      %2280 = vmatpush1.msra.mxu0 %v2274
      %2281 = vmatprep.subr.mxu0 0.0
      %2282 = vmatpush1.msra.mxu0 %v2275
      %2283 = vmatprep.subr.mxu0 0.0
      %2284 = vmatpush1.msra.mxu0 %v2276
      %2285 = vmatprep.subr.mxu0 0.0
      %2286 = vmatpush1.msra.mxu0 0.0
      %2287 = vmatprep.subr.mxu0 0.0
      %2288 = vmatpush1.msra.mxu0 0.0
      %2289 = vmatprep.subr.mxu0 0.0
      %2290 = vmatpush1.msra.mxu0 0.0
      %2291 = vmatprep.subr.mxu0 0.0
      %2292 = vmatpush1.msra.mxu0 0.0
      %2293 = vmatprep.subr.mxu0 0.0
      %2294 = vmatpush1.msra.mxu0 0.0
      %2295 = vmatprep.subr.mxu0 0.0
      %2296 = vmatpush1.msra.mxu0 0.0
      %2297 = vmatprep.subr.mxu0 0.0
      %2298 = vmatpush1.msra.mxu0 0.0
      %2299 = vmatprep.subr.mxu0 0.0
      %2300 = vmatpush1.msra.mxu0 0.0
      %2301 = vmatprep.subr.mxu0 0.0
      %2302 = vmatpush1.msra.mxu0 0.0
      %2303 = vmatprep.subr.mxu0 0.0
      %2304 = vmatpush1.msra.mxu0 0.0
      %2305 = vmatprep.subr.mxu0 0.0
      %2306 = vmatpush1.msra.mxu0 0.0
      %2307 = vmatprep.subr.mxu0 0.0
      %2308 = vmatpush1.msra.mxu0 0.0
      %2309 = vmatprep.subr.mxu0 0.0
      %2310 = vmatpush1.msra.mxu0 0.0
      %2311 = vmatprep.subr.mxu0 0.0
      %2312 = vmatpush1.msra.mxu0 0.0
      %2313 = vmatprep.subr.mxu0 0.0
      %2314 = vmatpush1.msra.mxu0 0.0
      %2315 = vmatprep.subr.mxu0 0.0
      %2316 = vmatpush1.msra.mxu0 0.0
      %2317 = vmatprep.subr.mxu0 0.0
      %2318 = vmatpush1.msra.mxu0 0.0
      %2319 = vmatprep.subr.mxu0 0.0
      %2320 = vmatpush1.msra.mxu0 0.0
      %2321 = vmatprep.subr.mxu0 0.0
      %2322 = vmatpush1.msra.mxu0 0.0
      %2323 = vmatprep.subr.mxu0 0.0
      %2324 = vmatpush1.msra.mxu0 0.0
      %2325 = vmatprep.subr.mxu0 0.0
      %2326 = vmatpush1.msra.mxu0 0.0
      %2327 = vmatprep.subr.mxu0 0.0
      %2328 = vmatpush1.msra.mxu0 0.0
      %2329 = vmatprep.subr.mxu0 0.0
      %2330 = vmatpush1.msra.mxu0 0.0
      %2331 = vmatprep.subr.mxu0 0.0
      %2332 = vmatpush1.msra.mxu0 0.0
      %2333 = vmatprep.subr.mxu0 0.0
      %2334 = vmatpush1.msra.mxu0 0.0
      %2335 = vmatprep.subr.mxu0 0.0
      %2336 = vmatpush1.msra.mxu0 0.0
      %2337 = vmatprep.subr.mxu0 0.0
      %2338 = vmatpush1.msra.mxu0 0.0
      %2339 = vmatprep.subr.mxu0 0.0
      %2340 = vmatpush1.msra.mxu0 0.0
      %2341 = vmatprep.mubr.f32.mxu0 0.0
      %2342 = vmatmul.mubr.f32.gmra.mrb[0].mxu0 %v962
      %v2343 = vpop.f32.mrb[0].mxu0
      %v2344 = vadd.f32 0.0, %v2343
      %v2345 = vpop.f32.mrb[0].mxu0
      %2346 = vmatprep.mubr.f32.mxu0 0.0
      %2347 = vmatmul.mubr.f32.gmra.mrb[0].mxu0 %v965
      %v2348 = vpop.f32.mrb[0].mxu0
      %v2349 = vadd.f32 0.0, %v2348
      %v2350 = vpop.f32.mrb[0].mxu0
      %2351 = vmatprep.mubr.f32.mxu0 0.0
      %2352 = vmatmul.mubr.f32.gmra.mrb[0].mxu0 %v968
      %v2353 = vpop.f32.mrb[0].mxu0
      %v2354 = vadd.f32 0.0, %v2353
      %v2355 = vpop.f32.mrb[0].mxu0
      %2356 = vmatprep.mubr.f32.mxu0 0.0
      %2357 = vmatmul.mubr.f32.gmra.mrb[0].mxu0 %v971
      %v2358 = vpop.f32.mrb[0].mxu0
      %v2359 = vadd.f32 0.0, %v2358
      %v2360 = vpop.f32.mrb[0].mxu0
      %2361 = vdwg.mxu0
      %v2363 = vsel %vm124, %v2344, 0
      %v2366 = vsel %vm124, %v2349, 0
      %v2369 = vsel %vm124, %v2354, 0
      %v2372 = vsel %vm124, %v2359, 0
      %2374 = vmatprep.subr.mxu0 0.0
      %2375 = vmatpush1.msra.mxu0 %v86
      %2376 = vmatprep.subr.mxu0 0.0
      %2377 = vmatpush1.msra.mxu0 %v87
      %2378 = vmatprep.subr.mxu0 0.0
      %2379 = vmatpush1.msra.mxu0 %v88
      %2380 = vmatprep.subr.mxu0 0.0
      %2381 = vmatpush1.msra.mxu0 %v89
      %2382 = vmatprep.subr.mxu0 0.0
      %2383 = vmatpush1.msra.mxu0 0.0
      %2384 = vmatprep.subr.mxu0 0.0
      %2385 = vmatpush1.msra.mxu0 0.0
      %2386 = vmatprep.subr.mxu0 0.0
      %2387 = vmatpush1.msra.mxu0 0.0
      %2388 = vmatprep.subr.mxu0 0.0
      %2389 = vmatpush1.msra.mxu0 0.0
      %2390 = vmatprep.subr.mxu0 0.0
      %2391 = vmatpush1.msra.mxu0 0.0
      %2392 = vmatprep.subr.mxu0 0.0
      %2393 = vmatpush1.msra.mxu0 0.0
      %2394 = vmatprep.subr.mxu0 0.0
      %2395 = vmatpush1.msra.mxu0 0.0
      %2396 = vmatprep.subr.mxu0 0.0
      %2397 = vmatpush1.msra.mxu0 0.0
      %2398 = vmatprep.subr.mxu0 0.0
      %2399 = vmatpush1.msra.mxu0 0.0
      %2400 = vmatprep.subr.mxu0 0.0
      %2401 = vmatpush1.msra.mxu0 0.0
      %2402 = vmatprep.subr.mxu0 0.0
      %2403 = vmatpush1.msra.mxu0 0.0
      %2404 = vmatprep.subr.mxu0 0.0
      %2405 = vmatpush1.msra.mxu0 0.0
      %2406 = vmatprep.subr.mxu0 0.0
      %2407 = vmatpush1.msra.mxu0 0.0
      %2408 = vmatprep.subr.mxu0 0.0
      %2409 = vmatpush1.msra.mxu0 0.0
      %2410 = vmatprep.subr.mxu0 0.0
      %2411 = vmatpush1.msra.mxu0 0.0
      %2412 = vmatprep.subr.mxu0 0.0
      %2413 = vmatpush1.msra.mxu0 0.0
      %2414 = vmatprep.subr.mxu0 0.0
      %2415 = vmatpush1.msra.mxu0 0.0
      %2416 = vmatprep.subr.mxu0 0.0
      %2417 = vmatpush1.msra.mxu0 0.0
      %2418 = vmatprep.subr.mxu0 0.0
      %2419 = vmatpush1.msra.mxu0 0.0
      %2420 = vmatprep.subr.mxu0 0.0
      %2421 = vmatpush1.msra.mxu0 0.0
      %2422 = vmatprep.subr.mxu0 0.0
      %2423 = vmatpush1.msra.mxu0 0.0
      %2424 = vmatprep.subr.mxu0 0.0
      %2425 = vmatpush1.msra.mxu0 0.0
      %2426 = vmatprep.subr.mxu0 0.0
      %2427 = vmatpush1.msra.mxu0 0.0
      %2428 = vmatprep.subr.mxu0 0.0
      %2429 = vmatpush1.msra.mxu0 0.0
      %2430 = vmatprep.subr.mxu0 0.0
      %2431 = vmatpush1.msra.mxu0 0.0
      %2432 = vmatprep.subr.mxu0 0.0
      %2433 = vmatpush1.msra.mxu0 0.0
      %2434 = vmatprep.subr.mxu0 0.0
      %2435 = vmatpush1.msra.mxu0 0.0
      %2436 = vmatprep.subr.mxu0 0.0
      %2437 = vmatpush1.msra.mxu0 0.0
      %2438 = vmatprep.mubr.f32.mxu0 0.0
      %2439 = vmatmul.mubr.f32.gmra.mrb[0].mxu0 %v2363
      %v2440 = vpop.f32.mrb[0].mxu0
      %v2441 = vadd.f32 0.0, %v2440
      %v2442 = vpop.f32.mrb[0].mxu0
      %2443 = vmatprep.mubr.f32.mxu0 0.0
      %2444 = vmatmul.mubr.f32.gmra.mrb[0].mxu0 %v2366
      %v2445 = vpop.f32.mrb[0].mxu0
      %v2446 = vadd.f32 0.0, %v2445
      %v2447 = vpop.f32.mrb[0].mxu0
      %2448 = vmatprep.mubr.f32.mxu0 0.0
      %2449 = vmatmul.mubr.f32.gmra.mrb[0].mxu0 %v2369
      %v2450 = vpop.f32.mrb[0].mxu0
      %v2451 = vadd.f32 0.0, %v2450
      %v2452 = vpop.f32.mrb[0].mxu0
      %2453 = vmatprep.mubr.f32.mxu0 0.0
      %2454 = vmatmul.mubr.f32.gmra.mrb[0].mxu0 %v2372
      %v2455 = vpop.f32.mrb[0].mxu0
      %v2456 = vadd.f32 0.0, %v2455
      %v2457 = vpop.f32.mrb[0].mxu0
      %2458 = vdwg.mxu0
      %vm2459 = vcmp.gt.f32.partialorder %v2441, 0.5
      %vm2460 = vcmp.gt.f32.partialorder %v2446, 0.5
      %vm2461 = vcmp.gt.f32.partialorder %v2451, 0.5
      %vm2462 = vcmp.gt.f32.partialorder %v2456, 0.5
      %v2463 = vsel %vm2459, %v2263, 0.0
      %v2464 = vsel %vm2460, %v2264, 0.0
      %v2465 = vsel %vm2461, %v2265, 0.0
      %v2466 = vsel %vm2462, %v2266, 0.0
    $region30: #{cifarnet_forward.1} parent=1 // loop_footer
      %s2272 = sadd.s32 1, %s2268
    $region31: #{cifarnet_forward.1} parent=1 // loop_footer_branch
      %2267 = sbr.rel target = $region27
    $region32: #{cifarnet_forward.1} parent=1 // loop_exit
      _
    %v2467 = vmul.f32 %v2273, 2.0
    %v2468 = vmul.f32 %v2274, 2.0
    %v2469 = vmul.f32 %v2275, 2.0
    %v2470 = vmul.f32 %v2276, 2.0
    %v2471 = vsub.f32 %v2467, 1.0
    %v2472 = vsub.f32 %v2468, 1.0
    %v2473 = vsub.f32 %v2469, 1.0
    %v2474 = vsub.f32 %v2470, 1.0
    %2475 = vst.msk [vmem:[#allocation8] sm:$0xff] %vm124, %v2471
    %2476 = vst.msk [vmem:[#allocation8 + $0x8] sm:$0xff] %vm124, %v2472
    %2477 = vst.msk [vmem:[#allocation8 + $0x10] sm:$0xff] %vm124, %v2473
    %2478 = vst.msk [vmem:[#allocation8 + $0x18] sm:$0xff] %vm124, %v2474
    // Predicated region
    $region33: #{cifarnet_forward.1} parent=1 // pred_check
      _
    $region34: #{cifarnet_forward.1} parent=1 // pred_check_branch
      %2480 = sbr.rel (0) target = $region36
    $region35: #{cifarnet_forward.1} parent=1 // pred_region
      %s2482 = ssub.s32 512, 512
      %2483 = vsyncadd [#allocation4], %s2482
      %s2484 = sshll.u32 [#allocation8], 4
      %s2485 = int_to_ptr.vmem [resolvable:$true] %s2484
      %2490 = dma.vmem_to_hbm [thread:$0]  %s2485, 512, %s3, [#allocation4], 128, 128, 8
    $region36: #{cifarnet_forward.1} parent=1 // pred_fallthru
      _
    // Predicated region
    $region37: #{cifarnet_forward.1} parent=1 // pred_check
      _
    $region38: #{cifarnet_forward.1} parent=1 // pred_check_branch
      %2492 = sbr.rel (0) target = $region40
    $region39: #{cifarnet_forward.1} parent=1 // pred_region
      %2493 = dma.done [#allocation4], 512
    $region40: #{cifarnet_forward.1} parent=1 // pred_fallthru
      _
    %2494 = vsyncpa [#allocation3], 1
    %2495 = vsyncpa [#allocation6], 1
    %2496 = vsyncpa [#allocation4], 1

</llo_original>
